<compile_context>
chip_gen: v6e
topology: v6e:2x2x1
jax: 0.10.0
libtpu: 0.0.40
codegen_flags: <defaults>
</compile_context>

<pallas_src>
import numpy as np
import jax
import jax.numpy as jnp
from jax.experimental import pallas as pl
from jax.experimental.pallas import tpu as pltpu

SR = 16000.0          # assumed sample rate for the mel filter initialisation
LRN_SIZE = 2          # TODO(synk): LocalResponseNorm size not in given source
LRN_ALPHA = 1e-4
LRN_BETA = 0.75
LRN_K = 1.0
TARGET_LANES = 8192   # lanes folded into one grid step (review: 2048-8192)


# ----------------------------------------------------------------------------
# Deterministic parameter construction (plain numpy, host-side)
# ----------------------------------------------------------------------------
def _hz_to_mel(f):
    return 2595.0 * np.log10(1.0 + f / 700.0)


def _mel_to_hz(m):
    return 700.0 * (10.0 ** (m / 2595.0) - 1.0)


def make_fir_filters(out_channels, kernel_size, window_k):
    """Mel-initialised windowed-sinc band-pass filter bank, (C_out, K) f32."""
    mel_pts = np.linspace(_hz_to_mel(30.0), _hz_to_mel(SR / 2.0 - 100.0),
                          out_channels + 1)
    hz = _mel_to_hz(mel_pts)
    f_low, f_high = hz[:-1] / SR, hz[1:] / SR
    K = kernel_size
    t = np.arange(K, dtype=np.float64) - (K - 1) / 2.0

    def lowpass(fc):
        return 2.0 * fc[:, None] * np.sinc(2.0 * fc[:, None] * t[None, :])

    band = lowpass(f_high) - lowpass(f_low)                    # (C_out, K)

    # generalized cosine window: Hann for window_k=2, Blackman for window_k=3
    if window_k == 2:
        coef = np.array([0.5, 0.5])
    elif window_k == 3:
        coef = np.array([0.42, 0.5, 0.08])
    else:
        coef = np.full((window_k,), 1.0 / window_k)
    n = np.arange(K, dtype=np.float64)
    win = np.zeros(K)
    for j, a in enumerate(coef):
        win += ((-1.0) ** j) * a * np.cos(2.0 * np.pi * j * n / max(K - 1, 1))
    return np.asarray(band * win[None, :], dtype=np.float32)


# ----------------------------------------------------------------------------
# Fused Pallas kernel: n_block x (im2col FIR matmul + LocalResponseNorm)
# ----------------------------------------------------------------------------
def _fir_lrn_stage(v, w_ref, patch_ref, K, C_in):
    """FirConv('same', stride 1) + LRN(size=2) on a lane-folded slab.

    v         : (C_in, L) f32.  L = bt*n_seg lanes; every n_seg-lane segment is
                one batch element and ends in >= (K-1)//2 zero halo lanes, so
                plain lane rotations realise 'same' zero padding exactly.
    w_ref     : (C_out, K*C_in) f32 resident weights, column index = k*C_in + c.
    patch_ref : (K*C_in, L) f32 VMEM scratch; each tap is written straight into
                it (live set capped at one tap, no concat relayout).
    returns   : (C_out, L) f32.  Tail lanes carry conv overhang; caller
                re-zeroes them before feeding the next stage.
    """
    L = v.shape[-1]
    pad_l = (K - 1) // 2               # torch Conv1d 'same' (odd K)

    for k in range(K):                 # static -> unrolled at trace time
        shift = (pad_l - k) % L        # rolled[p] == v[p + k - pad_l]
        rolled = v if shift == 0 else pltpu.roll(v, shift=shift, axis=1)
        patch_ref[k * C_in:(k + 1) * C_in, :] = rolled

    # One MXU matmul per block (C_out<=8 -> MXU ~5% utilised regardless, so
    # f32 costs nothing extra and keeps full precision).
    acc = jnp.dot(w_ref[...], patch_ref[...],
                  preferred_element_type=jnp.float32)          # (C_out, L)

    # LocalResponseNorm, size=2 (torch semantics: window [c-1, c]).
    sq = acc * acc
    prev = pltpu.roll(sq, shift=1, axis=0)                     # sublane rotate
    row = jax.lax.broadcasted_iota(jnp.int32, sq.shape, 0)
    prev = jnp.where(row == 0, 0.0, prev)                      # channel -1 -> 0
    base = LRN_K + (LRN_ALPHA / LRN_SIZE) * (sq + prev)
    r = jax.lax.rsqrt(base)                                    # EUP, not pow()
    return acc * (r * jnp.sqrt(r))                             # acc * base**-0.75


def _make_fused_kernel(kernel_sizes, in_chs, bt, n_seg):
    n_blk = len(kernel_sizes)

    def kernel(*refs):
        mask_ref, x_ref = refs[0], refs[1]                 # (1,L) f32 / (C0,L) f32
        w_refs = refs[2:2 + n_blk]
        o_ref = refs[2 + n_blk]                            # (bt, C_last, n_seg)
        patch_refs = refs[3 + n_blk:]                      # VMEM scratch, per block

        v = x_ref[...]                                     # (C0, L) f32
        acc = None
        for i in range(n_blk):                             # fused FrontEndBlocks
            acc = _fir_lrn_stage(v, w_refs[i], patch_refs[i],
                                 kernel_sizes[i], in_chs[i])
            if i < n_blk - 1:
                # Re-zero each segment's halo tail so stage i's conv overhang
                # cannot leak into stage i+1 through the rolled halo reads.
                v = acc * mask_ref[...]

        # Emit output directly in (bt, C_last, n_seg) layout: n_seg is a
        # multiple of 128 -> aligned, unmasked lane-dense stores; no
        # post-kernel transpose round trip through HBM.
        for b in range(bt):
            o_ref[b, :, :] = acc[:, b * n_seg:(b + 1) * n_seg].astype(o_ref.dtype)

    return kernel


def _tensorcores_per_chip():
    """2 TensorCores on v7x (where 'parallel' grid steps shard across cores);
    1 on v5e/v6e, where the grid is just a serial loop."""
    try:
        kind = jax.devices()[0].device_kind.lower()
    except Exception:
        return 1
    return 2 if ("v7" in kind or "7x" in kind) else 1


def _batch_tiling(B, n_seg, target_lanes=TARGET_LANES):
    """Pick (batches folded per grid step, number of grid steps)."""
    bt = max(1, min(B, target_lanes // max(n_seg, 1)))
    # Split into >=2 'parallel' grid steps only where a second TensorCore
    # exists (v7x).  On single-TC chips splitting just doubles the ~0.35us
    # per-step overhead for zero benefit.
    if _tensorcores_per_chip() >= 2 and B >= 2 and -(-B // bt) < 2:
        bt = -(-B // 2)
    return bt, -(-B // bt)


def fused_frontend(x, weights_2d, kernel_sizes, in_chs, out_channels,
                   out_dtype=jnp.float32, target_lanes=TARGET_LANES):
    """x: (B, C0, N) f32; weights_2d[i]: (C_{i+1}, K_i*C_i) f32 -> (B, C_last, N)."""
    B, C0, N = x.shape
    pad_max = max((k - 1) // 2 for k in kernel_sizes)
    # Per-batch segment length: lane-dense and carrying a zero halo tail of at
    # least pad_max lanes (this is what makes the per-tap masks unnecessary).
    n_seg = -(-(N + pad_max) // 128) * 128
    bt, steps = _batch_tiling(B, n_seg, target_lanes)
    b_pad = bt * steps
    L = bt * n_seg                               # lanes per grid step

    # Fold batch into the lane axis: (B, C0, N) -> (C0, b_pad * n_seg).
    if b_pad != B or n_seg != N:
        x = jnp.pad(x, ((0, b_pad - B), (0, 0), (0, n_seg - N)))
    x2d = x.transpose(1, 0, 2).reshape(C0, b_pad * n_seg)

    # Tiny resident (1, L) mask: 1 on valid samples, 0 on each segment's halo
    # tail.  Used once per inter-stage boundary (replaces 2*K compares+selects).
    seg_mask = (np.arange(n_seg) < N).astype(np.float32)
    tail_mask = jnp.asarray(np.tile(seg_mask, bt))[None, :]

    c_last = out_channels[-1]
    out_itemsize = jnp.dtype(out_dtype).itemsize
    kernel = _make_fused_kernel(tuple(kernel_sizes), tuple(in_chs), bt, n_seg)

    in_specs = [
        pl.BlockSpec((1, L), lambda i: (0, 0)),              # tail mask, resident
        pl.BlockSpec((C0, L), lambda i: (0, i)),             # x, lane-tiled
    ]
    for w in weights_2d:                                     # weights, resident
        in_specs.append(pl.BlockSpec(w.shape, lambda i: (0, 0)))

    scratch_shapes = [pltpu.VMEM((k * c, L), jnp.float32)
                      for k, c in zip(kernel_sizes, in_chs)]

    # Advisory cost estimate for the XLA scheduler.
    flops = int(2 * sum(o * c * k for o, c, k in
                        zip(out_channels, in_chs, kernel_sizes)) * b_pad * n_seg)
    transc = int(2 * sum(out_channels) * b_pad * n_seg)
    bytes_acc = int(x2d.size * 4 + tail_mask.size * 4
                    + sum(int(np.prod(w.shape)) * 4 for w in weights_2d)
                    + b_pad * c_last * n_seg * out_itemsize)

    # Per-step VMEM footprint (double-buffered I/O + scratch + live temporaries);
    # raise the scoped-VMEM limit accordingly (kept <= v7x's 64 MiB physical).
    vmem_need = (2 * C0 * L * 4 + 2 * bt * c_last * n_seg * out_itemsize
                 + L * 4
                 + sum(k * c * L * 4 for k, c in zip(kernel_sizes, in_chs))
                 + 6 * max(out_channels) * L * 4)
    vmem_limit = int(min(64 * 1024 * 1024, max(32 * 1024 * 1024, 2 * vmem_need)))

    out3d = pl.pallas_call(
        kernel,
        out_shape=jax.ShapeDtypeStruct((b_pad, c_last, n_seg), out_dtype),
        grid_spec=pltpu.PrefetchScalarGridSpec(
            num_scalar_prefetch=0,
            grid=(steps,),
            in_specs=in_specs,
            out_specs=pl.BlockSpec((bt, c_last, n_seg), lambda i: (i, 0, 0)),
            scratch_shapes=scratch_shapes),
        compiler_params=pltpu.CompilerParams(
            dimension_semantics=("parallel",),
            vmem_limit_bytes=vmem_limit),
        cost_estimate=pl.CostEstimate(flops=flops, transcendentals=transc,
                                      bytes_accessed=bytes_acc),
    )(tail_mask, x2d, *weights_2d)

    return out3d[:B, :, :N]


# ----------------------------------------------------------------------------
# FeBlocks: n_block chained FrontEndBlocks, fused into a single Pallas call.
# ----------------------------------------------------------------------------
class FeBlocksPallas:
    """pooling=None -> output (B, C_last, N). n_block=1 == one FrontEndBlock.

    output_dtype may be set to jnp.bfloat16 if the downstream consumer
    tolerates it (output writeback dominates HBM traffic)."""

    def __init__(self, n_block=2, n_input_channel=1, n_channel=(8, 8),
                 kernel_size=(5, 13), stride=(1, 1), window_k=(2, 3),
                 pooling=None, output_dtype=jnp.float32):
        assert n_block >= 1
        assert all(s == 1 for s in stride[:n_block])    # stride=1 only
        assert all(int(k) % 2 == 1 for k in kernel_size[:n_block]), \
            "'same' padding here assumes odd kernel sizes (torch-equivalent)"
        self.n_block = n_block
        self.pooling = pooling
        self.output_dtype = output_dtype
        self.kernel_sizes = tuple(int(k) for k in kernel_size[:n_block])
        self.out_channels = tuple(int(c) for c in n_channel[:n_block])
        self.in_chs = tuple([n_input_channel] + list(n_channel[:n_block - 1]))

        self.weights_3d = []    # (C_out, C_in, K) f32  (reference layout)
        self.weights_2d = []    # (C_out, K*C_in) f32   (kernel im2col layout)
        for i in range(n_block):
            filt = make_fir_filters(n_channel[i], kernel_size[i], window_k[i])
            # TODO(synk): exact multi-input-channel filter layout of
            # FirConvLayer unavailable; broadcast each per-output-channel FIR
            # across input channels and average over C_in.
            w = np.broadcast_to(
                filt[:, None, :],
                (n_channel[i], self.in_chs[i], kernel_size[i]))
            w = (w / float(self.in_chs[i])).astype(np.float32)
            self.weights_3d.append(jnp.asarray(w))
            w2d = w.transpose(0, 2, 1).reshape(
                n_channel[i], kernel_size[i] * self.in_chs[i])
            self.weights_2d.append(jnp.asarray(w2d, dtype=jnp.float32))

        self._forward = jax.jit(self._forward_impl)

    def _forward_impl(self, x):
        y = fused_frontend(x, self.weights_2d, self.kernel_sizes,
                           self.in_chs, self.out_channels,
                           out_dtype=self.output_dtype)
        if self.pooling is not None:
            red = {"max": jnp.max, "mean": jnp.mean,
                   "sum": jnp.sum, "min": jnp.min}[self.pooling]
            y = red(y, axis=-1)[..., None, :]       # '... c n -> ... 1 c'
        return y

    def __call__(self, x):
        return self._forward(x)


# ----------------------------------------------------------------------------
# Pure-JAX (XLA) reference for correctness checking
# ----------------------------------------------------------------------------
def _reference_forward(x, weights_3d):
    y = x
    for w in weights_3d:
        y = jax.lax.conv_general_dilated(
            y, w, window_strides=(1,), padding="SAME",
            dimension_numbers=("NCH", "OIH", "NCH"))
        sq = y * y
        prev = jnp.concatenate([jnp.zeros_like(sq[:, :1]), sq[:, :-1]], axis=1)
        div = jnp.power(LRN_K + LRN_ALPHA * (sq + prev) / LRN_SIZE, LRN_BETA)
        y = y / div
    return y


if __name__ == "__main__":
    key = jax.random.PRNGKey(0)
    B, C0, N = 4, 1, 128                       # small demo shapes
    x = jax.random.normal(key, (B, C0, N), dtype=jnp.float32)

    model = FeBlocksPallas(n_block=2, n_input_channel=C0, n_channel=(8, 8),
                           kernel_size=(5, 13), window_k=(2, 3), pooling=None)
    y = jax.block_until_ready(model(x))
    assert y.shape == (B, 8, N), y.shape
    assert bool(jnp.all(jnp.isfinite(y)))

    # Correctness vs. pure-JAX reference (all-f32 path -> tight tolerance).
    y_ref = _reference_forward(x, model.weights_3d)
    assert bool(jnp.allclose(y, y_ref, rtol=1e-3, atol=1e-4)), (
        "max abs err = %g" % float(jnp.max(jnp.abs(y - y_ref))))

    print("KERNEL_OK")
</pallas_src>

<mosaic_0001>
module attributes {stable_mosaic.version = 11 : i64} {
  func.func @kernel(%arg0: i32, %arg1: memref<1x1024xf32, #tpu.memory_space<vmem>>, %arg2: memref<1x1024xf32, #tpu.memory_space<vmem>>, %arg3: memref<8x5xf32, #tpu.memory_space<vmem>>, %arg4: memref<8x104xf32, #tpu.memory_space<vmem>>, %arg5: memref<4x8x256xf32, #tpu.memory_space<vmem>>, %arg6: memref<5x1024xf32, #tpu.memory_space<vmem>>, %arg7: memref<104x1024xf32, #tpu.memory_space<vmem>>) attributes {dimension_semantics = [#tpu.dimension_semantics<parallel>], iteration_bounds = array<i64: 1>, scalar_prefetch = 0 : i64, scratch_operands = 2 : i64, tpu.core_type = #tpu.core_type<tc>, window_params = [{pipeline_mode = #tpu.pipeline_mode<synchronous>, transform_indices = @transform_0, window_bounds = array<i64: 1, 1024>}, {transform_indices = @transform_1, window_bounds = array<i64: 1, 1024>}, {pipeline_mode = #tpu.pipeline_mode<synchronous>, transform_indices = @transform_2, window_bounds = array<i64: 8, 5>}, {pipeline_mode = #tpu.pipeline_mode<synchronous>, transform_indices = @transform_3, window_bounds = array<i64: 8, 104>}, {transform_indices = @transform_4, window_bounds = array<i64: 4, 8, 256>}]} {
    %c0 = arith.constant 0 : index
    %c0_0 = arith.constant 0 : index
    %0 = vector.load %arg2[%c0, %c0_0] : memref<1x1024xf32, #tpu.memory_space<vmem>>, vector<1x1024xf32>
    %c2_i32 = arith.constant 2 : i32
    %1 = tpu.dynamic_rotate %0 by %c2_i32 dim 1 : vector<1x1024xf32>, i32 -> vector<1x1024xf32>
    %c0_1 = arith.constant 0 : index
    %c0_2 = arith.constant 0 : index
    %2 = vector.load %arg6[%c0_1, %c0_2] : memref<5x1024xf32, #tpu.memory_space<vmem>>, vector<1x1024xf32>
    tpu.vector_store %arg6[%c0_1, %c0_2], %1 {strides = array<i32>} : memref<5x1024xf32, #tpu.memory_space<vmem>>, vector<1x1024xf32>,
    %c1_i32 = arith.constant 1 : i32
    %3 = tpu.dynamic_rotate %0 by %c1_i32 dim 1 : vector<1x1024xf32>, i32 -> vector<1x1024xf32>
    %c1 = arith.constant 1 : index
    %c0_3 = arith.constant 0 : index
    %4 = vector.load %arg6[%c1, %c0_3] : memref<5x1024xf32, #tpu.memory_space<vmem>>, vector<1x1024xf32>
    tpu.vector_store %arg6[%c1, %c0_3], %3 {strides = array<i32>} : memref<5x1024xf32, #tpu.memory_space<vmem>>, vector<1x1024xf32>,
    %c2 = arith.constant 2 : index
    %c0_4 = arith.constant 0 : index
    %5 = vector.load %arg6[%c2, %c0_4] : memref<5x1024xf32, #tpu.memory_space<vmem>>, vector<1x1024xf32>
    tpu.vector_store %arg6[%c2, %c0_4], %0 {strides = array<i32>} : memref<5x1024xf32, #tpu.memory_space<vmem>>, vector<1x1024xf32>,
    %c1023_i32 = arith.constant 1023 : i32
    %6 = tpu.dynamic_rotate %0 by %c1023_i32 dim 1 : vector<1x1024xf32>, i32 -> vector<1x1024xf32>
    %c3 = arith.constant 3 : index
    %c0_5 = arith.constant 0 : index
    %7 = vector.load %arg6[%c3, %c0_5] : memref<5x1024xf32, #tpu.memory_space<vmem>>, vector<1x1024xf32>
    tpu.vector_store %arg6[%c3, %c0_5], %6 {strides = array<i32>} : memref<5x1024xf32, #tpu.memory_space<vmem>>, vector<1x1024xf32>,
    %c1022_i32 = arith.constant 1022 : i32
    %8 = tpu.dynamic_rotate %0 by %c1022_i32 dim 1 : vector<1x1024xf32>, i32 -> vector<1x1024xf32>
    %c4 = arith.constant 4 : index
    %c0_6 = arith.constant 0 : index
    %9 = vector.load %arg6[%c4, %c0_6] : memref<5x1024xf32, #tpu.memory_space<vmem>>, vector<1x1024xf32>
    tpu.vector_store %arg6[%c4, %c0_6], %8 {strides = array<i32>} : memref<5x1024xf32, #tpu.memory_space<vmem>>, vector<1x1024xf32>,
    %c0_7 = arith.constant 0 : index
    %c0_8 = arith.constant 0 : index
    %10 = vector.load %arg3[%c0_7, %c0_8] : memref<8x5xf32, #tpu.memory_space<vmem>>, vector<8x5xf32>
    %c0_9 = arith.constant 0 : index
    %c0_10 = arith.constant 0 : index
    %11 = vector.load %arg6[%c0_9, %c0_10] : memref<5x1024xf32, #tpu.memory_space<vmem>>, vector<5x1024xf32>
    %cst = arith.constant dense<0.000000e+00> : vector<8x1024xf32>
    %12 = tpu.matmul %10, %11, %cst {dimension_numbers = #tpu.dot_dimension_numbers<[1], [0], [0], [1], [0, 0, 1, 1], [], []>} : vector<8x5xf32>, vector<5x1024xf32>, vector<8x1024xf32> -> vector<8x1024xf32>
    %13 = arith.mulf %12, %12 : vector<8x1024xf32>
    %c1_i32_11 = arith.constant 1 : i32
    %14 = tpu.dynamic_rotate %13 by %c1_i32_11 dim 0 : vector<8x1024xf32>, i32 -> vector<8x1024xf32>
    %15 = tpu.iota {dimensions = array<i32: 0>} : vector<8x1024xi32>
    %c0_i32 = arith.constant 0 : i32
    %16 = vector.broadcast %c0_i32 : i32 to vector<8x1024xi32>
    %17 = arith.cmpi eq, %15, %16 : vector<8x1024xi32>
    %cst_12 = arith.constant 0.000000e+00 : f32
    %18 = vector.broadcast %cst_12 : f32 to vector<8x1024xf32>
    %19 = arith.select %17, %18, %14 : vector<8x1024xi1>, vector<8x1024xf32>
    %20 = arith.addf %13, %19 : vector<8x1024xf32>
    %cst_13 = arith.constant 5.000000e-05 : f32
    %21 = vector.broadcast %cst_13 : f32 to vector<8x1024xf32>
    %22 = arith.mulf %21, %20 : vector<8x1024xf32>
    %cst_14 = arith.constant 1.000000e+00 : f32
    %23 = vector.broadcast %cst_14 : f32 to vector<8x1024xf32>
    %24 = arith.addf %23, %22 : vector<8x1024xf32>
    %25 = math.rsqrt %24 : vector<8x1024xf32>
    %26 = math.sqrt %25 : vector<8x1024xf32>
    %27 = arith.mulf %25, %26 : vector<8x1024xf32>
    %28 = arith.mulf %12, %27 : vector<8x1024xf32>
    %c0_15 = arith.constant 0 : index
    %c0_16 = arith.constant 0 : index
    %29 = vector.load %arg1[%c0_15, %c0_16] : memref<1x1024xf32, #tpu.memory_space<vmem>>, vector<1x1024xf32>
    %30 = vector.broadcast %29 : vector<1x1024xf32> to vector<8x1024xf32>
    %31 = arith.mulf %28, %30 : vector<8x1024xf32>
    %c6_i32 = arith.constant 6 : i32
    %32 = tpu.dynamic_rotate %31 by %c6_i32 dim 1 : vector<8x1024xf32>, i32 -> vector<8x1024xf32>
    %c0_17 = arith.constant 0 : index
    %c0_18 = arith.constant 0 : index
    %33 = vector.load %arg7[%c0_17, %c0_18] : memref<104x1024xf32, #tpu.memory_space<vmem>>, vector<8x1024xf32>
    tpu.vector_store %arg7[%c0_17, %c0_18], %32 {strides = array<i32>} : memref<104x1024xf32, #tpu.memory_space<vmem>>, vector<8x1024xf32>,
    %c5_i32 = arith.constant 5 : i32
    %34 = tpu.dynamic_rotate %31 by %c5_i32 dim 1 : vector<8x1024xf32>, i32 -> vector<8x1024xf32>
    %c8 = arith.constant 8 : index
    %c0_19 = arith.constant 0 : index
    %35 = vector.load %arg7[%c8, %c0_19] : memref<104x1024xf32, #tpu.memory_space<vmem>>, vector<8x1024xf32>
    tpu.vector_store %arg7[%c8, %c0_19], %34 {strides = array<i32>} : memref<104x1024xf32, #tpu.memory_space<vmem>>, vector<8x1024xf32>,
    %c4_i32 = arith.constant 4 : i32
    %36 = tpu.dynamic_rotate %31 by %c4_i32 dim 1 : vector<8x1024xf32>, i32 -> vector<8x1024xf32>
    %c16 = arith.constant 16 : index
    %c0_20 = arith.constant 0 : index
    %37 = vector.load %arg7[%c16, %c0_20] : memref<104x1024xf32, #tpu.memory_space<vmem>>, vector<8x1024xf32>
    tpu.vector_store %arg7[%c16, %c0_20], %36 {strides = array<i32>} : memref<104x1024xf32, #tpu.memory_space<vmem>>, vector<8x1024xf32>,
    %c3_i32 = arith.constant 3 : i32
    %38 = tpu.dynamic_rotate %31 by %c3_i32 dim 1 : vector<8x1024xf32>, i32 -> vector<8x1024xf32>
    %c24 = arith.constant 24 : index
    %c0_21 = arith.constant 0 : index
    %39 = vector.load %arg7[%c24, %c0_21] : memref<104x1024xf32, #tpu.memory_space<vmem>>, vector<8x1024xf32>
    tpu.vector_store %arg7[%c24, %c0_21], %38 {strides = array<i32>} : memref<104x1024xf32, #tpu.memory_space<vmem>>, vector<8x1024xf32>,
    %c2_i32_22 = arith.constant 2 : i32
    %40 = tpu.dynamic_rotate %31 by %c2_i32_22 dim 1 : vector<8x1024xf32>, i32 -> vector<8x1024xf32>
    %c32 = arith.constant 32 : index
    %c0_23 = arith.constant 0 : index
    %41 = vector.load %arg7[%c32, %c0_23] : memref<104x1024xf32, #tpu.memory_space<vmem>>, vector<8x1024xf32>
    tpu.vector_store %arg7[%c32, %c0_23], %40 {strides = array<i32>} : memref<104x1024xf32, #tpu.memory_space<vmem>>, vector<8x1024xf32>,
    %c1_i32_24 = arith.constant 1 : i32
    %42 = tpu.dynamic_rotate %31 by %c1_i32_24 dim 1 : vector<8x1024xf32>, i32 -> vector<8x1024xf32>
    %c40 = arith.constant 40 : index
    %c0_25 = arith.constant 0 : index
    %43 = vector.load %arg7[%c40, %c0_25] : memref<104x1024xf32, #tpu.memory_space<vmem>>, vector<8x1024xf32>
    tpu.vector_store %arg7[%c40, %c0_25], %42 {strides = array<i32>} : memref<104x1024xf32, #tpu.memory_space<vmem>>, vector<8x1024xf32>,
    %c48 = arith.constant 48 : index
    %c0_26 = arith.constant 0 : index
    %44 = vector.load %arg7[%c48, %c0_26] : memref<104x1024xf32, #tpu.memory_space<vmem>>, vector<8x1024xf32>
    tpu.vector_store %arg7[%c48, %c0_26], %31 {strides = array<i32>} : memref<104x1024xf32, #tpu.memory_space<vmem>>, vector<8x1024xf32>,
    %c1023_i32_27 = arith.constant 1023 : i32
    %45 = tpu.dynamic_rotate %31 by %c1023_i32_27 dim 1 : vector<8x1024xf32>, i32 -> vector<8x1024xf32>
    %c56 = arith.constant 56 : index
    %c0_28 = arith.constant 0 : index
    %46 = vector.load %arg7[%c56, %c0_28] : memref<104x1024xf32, #tpu.memory_space<vmem>>, vector<8x1024xf32>
    tpu.vector_store %arg7[%c56, %c0_28], %45 {strides = array<i32>} : memref<104x1024xf32, #tpu.memory_space<vmem>>, vector<8x1024xf32>,
    %c1022_i32_29 = arith.constant 1022 : i32
    %47 = tpu.dynamic_rotate %31 by %c1022_i32_29 dim 1 : vector<8x1024xf32>, i32 -> vector<8x1024xf32>
    %c64 = arith.constant 64 : index
    %c0_30 = arith.constant 0 : index
    %48 = vector.load %arg7[%c64, %c0_30] : memref<104x1024xf32, #tpu.memory_space<vmem>>, vector<8x1024xf32>
    tpu.vector_store %arg7[%c64, %c0_30], %47 {strides = array<i32>} : memref<104x1024xf32, #tpu.memory_space<vmem>>, vector<8x1024xf32>,
    %c1021_i32 = arith.constant 1021 : i32
    %49 = tpu.dynamic_rotate %31 by %c1021_i32 dim 1 : vector<8x1024xf32>, i32 -> vector<8x1024xf32>
    %c72 = arith.constant 72 : index
    %c0_31 = arith.constant 0 : index
    %50 = vector.load %arg7[%c72, %c0_31] : memref<104x1024xf32, #tpu.memory_space<vmem>>, vector<8x1024xf32>
    tpu.vector_store %arg7[%c72, %c0_31], %49 {strides = array<i32>} : memref<104x1024xf32, #tpu.memory_space<vmem>>, vector<8x1024xf32>,
    %c1020_i32 = arith.constant 1020 : i32
    %51 = tpu.dynamic_rotate %31 by %c1020_i32 dim 1 : vector<8x1024xf32>, i32 -> vector<8x1024xf32>
    %c80 = arith.constant 80 : index
    %c0_32 = arith.constant 0 : index
    %52 = vector.load %arg7[%c80, %c0_32] : memref<104x1024xf32, #tpu.memory_space<vmem>>, vector<8x1024xf32>
    tpu.vector_store %arg7[%c80, %c0_32], %51 {strides = array<i32>} : memref<104x1024xf32, #tpu.memory_space<vmem>>, vector<8x1024xf32>,
    %c1019_i32 = arith.constant 1019 : i32
    %53 = tpu.dynamic_rotate %31 by %c1019_i32 dim 1 : vector<8x1024xf32>, i32 -> vector<8x1024xf32>
    %c88 = arith.constant 88 : index
    %c0_33 = arith.constant 0 : index
    %54 = vector.load %arg7[%c88, %c0_33] : memref<104x1024xf32, #tpu.memory_space<vmem>>, vector<8x1024xf32>
    tpu.vector_store %arg7[%c88, %c0_33], %53 {strides = array<i32>} : memref<104x1024xf32, #tpu.memory_space<vmem>>, vector<8x1024xf32>,
    %c1018_i32 = arith.constant 1018 : i32
    %55 = tpu.dynamic_rotate %31 by %c1018_i32 dim 1 : vector<8x1024xf32>, i32 -> vector<8x1024xf32>
    %c96 = arith.constant 96 : index
    %c0_34 = arith.constant 0 : index
    %56 = vector.load %arg7[%c96, %c0_34] : memref<104x1024xf32, #tpu.memory_space<vmem>>, vector<8x1024xf32>
    tpu.vector_store %arg7[%c96, %c0_34], %55 {strides = array<i32>} : memref<104x1024xf32, #tpu.memory_space<vmem>>, vector<8x1024xf32>,
    %c0_35 = arith.constant 0 : index
    %c0_36 = arith.constant 0 : index
    %57 = vector.load %arg4[%c0_35, %c0_36] : memref<8x104xf32, #tpu.memory_space<vmem>>, vector<8x104xf32>
    %c0_37 = arith.constant 0 : index
    %c0_38 = arith.constant 0 : index
    %58 = vector.load %arg7[%c0_37, %c0_38] : memref<104x1024xf32, #tpu.memory_space<vmem>>, vector<104x1024xf32>
    %cst_39 = arith.constant dense<0.000000e+00> : vector<8x1024xf32>
    %59 = tpu.matmul %57, %58, %cst_39 {dimension_numbers = #tpu.dot_dimension_numbers<[1], [0], [0], [1], [0, 0, 1, 1], [], []>} : vector<8x104xf32>, vector<104x1024xf32>, vector<8x1024xf32> -> vector<8x1024xf32>
    %60 = arith.mulf %59, %59 : vector<8x1024xf32>
    %c1_i32_40 = arith.constant 1 : i32
    %61 = tpu.dynamic_rotate %60 by %c1_i32_40 dim 0 : vector<8x1024xf32>, i32 -> vector<8x1024xf32>
    %62 = tpu.iota {dimensions = array<i32: 0>} : vector<8x1024xi32>
    %c0_i32_41 = arith.constant 0 : i32
    %63 = vector.broadcast %c0_i32_41 : i32 to vector<8x1024xi32>
    %64 = arith.cmpi eq, %62, %63 : vector<8x1024xi32>
    %cst_42 = arith.constant 0.000000e+00 : f32
    %65 = vector.broadcast %cst_42 : f32 to vector<8x1024xf32>
    %66 = arith.select %64, %65, %61 : vector<8x1024xi1>, vector<8x1024xf32>
    %67 = arith.addf %60, %66 : vector<8x1024xf32>
    %cst_43 = arith.constant 5.000000e-05 : f32
    %68 = vector.broadcast %cst_43 : f32 to vector<8x1024xf32>
    %69 = arith.mulf %68, %67 : vector<8x1024xf32>
    %cst_44 = arith.constant 1.000000e+00 : f32
    %70 = vector.broadcast %cst_44 : f32 to vector<8x1024xf32>
    %71 = arith.addf %70, %69 : vector<8x1024xf32>
    %72 = math.rsqrt %71 : vector<8x1024xf32>
    %73 = math.sqrt %72 : vector<8x1024xf32>
    %74 = arith.mulf %72, %73 : vector<8x1024xf32>
    %75 = arith.mulf %59, %74 : vector<8x1024xf32>
    %76 = vector.extract_strided_slice %75 {offsets = [0, 0], sizes = [8, 256], strides = [1, 1]} : vector<8x1024xf32> to vector<8x256xf32>
    %c0_45 = arith.constant 0 : index
    %c0_46 = arith.constant 0 : index
    %c0_47 = arith.constant 0 : index
    %77 = vector.load %arg5[%c0_45, %c0_46, %c0_47] : memref<4x8x256xf32, #tpu.memory_space<vmem>>, vector<1x8x256xf32>
    %78 = vector.shape_cast %77 : vector<1x8x256xf32> to vector<8x256xf32>
    %79 = vector.shape_cast %76 : vector<8x256xf32> to vector<1x8x256xf32>
    tpu.vector_store %arg5[%c0_45, %c0_46, %c0_47], %79 {strides = array<i32>} : memref<4x8x256xf32, #tpu.memory_space<vmem>>, vector<1x8x256xf32>,
    %80 = vector.extract_strided_slice %75 {offsets = [0, 256], sizes = [8, 256], strides = [1, 1]} : vector<8x1024xf32> to vector<8x256xf32>
    %c1_48 = arith.constant 1 : index
    %c0_49 = arith.constant 0 : index
    %c0_50 = arith.constant 0 : index
    %81 = vector.load %arg5[%c1_48, %c0_49, %c0_50] : memref<4x8x256xf32, #tpu.memory_space<vmem>>, vector<1x8x256xf32>
    %82 = vector.shape_cast %81 : vector<1x8x256xf32> to vector<8x256xf32>
    %83 = vector.shape_cast %80 : vector<8x256xf32> to vector<1x8x256xf32>
    tpu.vector_store %arg5[%c1_48, %c0_49, %c0_50], %83 {strides = array<i32>} : memref<4x8x256xf32, #tpu.memory_space<vmem>>, vector<1x8x256xf32>,
    %84 = vector.extract_strided_slice %75 {offsets = [0, 512], sizes = [8, 256], strides = [1, 1]} : vector<8x1024xf32> to vector<8x256xf32>
    %c2_51 = arith.constant 2 : index
    %c0_52 = arith.constant 0 : index
    %c0_53 = arith.constant 0 : index
    %85 = vector.load %arg5[%c2_51, %c0_52, %c0_53] : memref<4x8x256xf32, #tpu.memory_space<vmem>>, vector<1x8x256xf32>
    %86 = vector.shape_cast %85 : vector<1x8x256xf32> to vector<8x256xf32>
    %87 = vector.shape_cast %84 : vector<8x256xf32> to vector<1x8x256xf32>
    tpu.vector_store %arg5[%c2_51, %c0_52, %c0_53], %87 {strides = array<i32>} : memref<4x8x256xf32, #tpu.memory_space<vmem>>, vector<1x8x256xf32>,
    %88 = vector.extract_strided_slice %75 {offsets = [0, 768], sizes = [8, 256], strides = [1, 1]} : vector<8x1024xf32> to vector<8x256xf32>
    %c3_54 = arith.constant 3 : index
    %c0_55 = arith.constant 0 : index
    %c0_56 = arith.constant 0 : index
    %89 = vector.load %arg5[%c3_54, %c0_55, %c0_56] : memref<4x8x256xf32, #tpu.memory_space<vmem>>, vector<1x8x256xf32>
    %90 = vector.shape_cast %89 : vector<1x8x256xf32> to vector<8x256xf32>
    %91 = vector.shape_cast %88 : vector<8x256xf32> to vector<1x8x256xf32>
    tpu.vector_store %arg5[%c3_54, %c0_55, %c0_56], %91 {strides = array<i32>} : memref<4x8x256xf32, #tpu.memory_space<vmem>>, vector<1x8x256xf32>,
    return
  }
  func.func @transform_0(%arg0: i32) -> (i32, i32) {
    %c0_i32 = arith.constant 0 : i32
    %c0_i32_0 = arith.constant 0 : i32
    %c0_i32_1 = arith.constant 0 : i32
    return %c0_i32, %c0_i32_0 : i32, i32
  }
  func.func @transform_1(%arg0: i32) -> (i32, i32) {
    %c0_i32 = arith.constant 0 : i32
    %c0_i32_0 = arith.constant 0 : i32
    return %c0_i32, %arg0 : i32, i32
  }
  func.func @transform_2(%arg0: i32) -> (i32, i32) {
    %c0_i32 = arith.constant 0 : i32
    %c0_i32_0 = arith.constant 0 : i32
    %c0_i32_1 = arith.constant 0 : i32
    return %c0_i32, %c0_i32_0 : i32, i32
  }
  func.func @transform_3(%arg0: i32) -> (i32, i32) {
    %c0_i32 = arith.constant 0 : i32
    %c0_i32_0 = arith.constant 0 : i32
    %c0_i32_1 = arith.constant 0 : i32
    return %c0_i32, %c0_i32_0 : i32, i32
  }
  func.func @transform_4(%arg0: i32) -> (i32, i32, i32) {
    %c0_i32 = arith.constant 0 : i32
    %c0_i32_0 = arith.constant 0 : i32
    %c0_i32_1 = arith.constant 0 : i32
    return %arg0, %c0_i32, %c0_i32_0 : i32, i32, i32
  }
}

</mosaic_0001>

<llo_original>
// kernel: _forward_impl.1
$region0: #{_forward_impl.1}
  #allocation0 [shape = 'u32[]', space=smem, size = 0x4, offset = 0x4, fixed_abs, tag = 'smem constant byte address 0x4 - core index']
  #allocation1 [shape = 'u32[144,128]{1,0:T(1,128)}', space=vmem, size = 0x12000, scoped, tag = 'internal scratch']
  #allocation2 [shape = 'f32[5,1024]{1,0:T(8,128)}', space=vmem, size = 0x8000, scoped, tag = 'scratch operand']
  #allocation3 [shape = 'f32[104,1024]{1,0:T(8,128)}', space=vmem, size = 0x68000, scoped, tag = 'scratch operand']
  %s0 = inlined_call_operand.hbm [shape: f32[1,1024], index: 0, kind: input, shape index: {}]
  %s1 = inlined_call_operand.vmem [shape: f32[1,1024], index: 1, kind: input, shape index: {}]
  %s2 = inlined_call_operand.vmem [shape: f32[8,5], index: 2, kind: input, shape index: {}]
  %s3 = inlined_call_operand.vmem [shape: f32[8,104], index: 3, kind: input, shape index: {}]
  %s4 = inlined_call_operand.vmem [shape: f32[4,8,256], index: 4, kind: output, shape index: {}]
  %s5 = sld [smem:[#allocation0]]
  $region30: #{_forward_impl.1} parent=0
    _
  %s7 = ssub.s32 1, %s5
  %s8 = scalar_select 0, %s7, %s5
  $region1: #{_forward_impl.1} parent=0
    #allocation4 [shape = 'u8[4096]{0}', space=vmem, size = 0x1000, scoped, tag = 'input window, operand 0, single buffered']
    #allocation5 [shape = 's32[1]{0}', space=sflag, size = 0x4, scoped, tag = 'scoped memory for _forward_impl.1']
    %9 = vsyncpa [#allocation5], 0
    // Predicated region
    $region2: #{_forward_impl.1} parent=1 // pred_check
      _
    $region3: #{_forward_impl.1} parent=1 // pred_check_branch
      %11 = sbr.rel (0) target = $region5
    $region4: #{_forward_impl.1} parent=1 // pred_region
      %s13 = ssub.s32 128, 128
      %14 = vsyncadd [#allocation5], %s13
      %s16 = sshll.u32 [#allocation4], 4
      %s17 = int_to_ptr.vmem [resolvable:$true] %s16
      %19 = dma.hbm_to_vmem [thread:$0]  %s0, 128, %s17, [#allocation5]
    $region5: #{_forward_impl.1} parent=1 // pred_fallthru
      _
    // Predicated region
    $region6: #{_forward_impl.1} parent=1 // pred_check
      _
    $region7: #{_forward_impl.1} parent=1 // pred_check_branch
      %21 = sbr.rel (0) target = $region9
    $region8: #{_forward_impl.1} parent=1 // pred_region
      _
    $region9: #{_forward_impl.1} parent=1 // pred_fallthru
      _
    // Predicated region
    $region10: #{_forward_impl.1} parent=1 // pred_check
      _
    $region11: #{_forward_impl.1} parent=1 // pred_check_branch
      %23 = sbr.rel (0) target = $region13
    $region12: #{_forward_impl.1} parent=1 // pred_region
      _
    $region13: #{_forward_impl.1} parent=1 // pred_fallthru
      _
    // Predicated region
    $region14: #{_forward_impl.1} parent=1 // pred_check
      _
    $region15: #{_forward_impl.1} parent=1 // pred_check_branch
      %25 = sbr.rel (0) target = $region17
    $region16: #{_forward_impl.1} parent=1 // pred_region
      _
    $region17: #{_forward_impl.1} parent=1 // pred_fallthru
      _
    // Predicated region
    $region18: #{_forward_impl.1} parent=1 // pred_check
      _
    $region19: #{_forward_impl.1} parent=1 // pred_check_branch
      %27 = sbr.rel (0) target = $region21
    $region20: #{_forward_impl.1} parent=1 // pred_region
      %28 = dma.done [#allocation5], 128
    $region21: #{_forward_impl.1} parent=1 // pred_fallthru
      _
    %v29 = vld [vmem:[%s1] sm:$0xff]
    %v31 = vlaneseq
    %v32 = vshrl.u32 %v31, 7
    %v33 = vsub.s32 0, %v32
    %v34 = vrot.slane %v29, %v33
    %v35 = vlaneseq
    %v36 = vshrl.u32 %v35, 7
    %v37 = vsub.s32 1, %v36
    %v38 = vrot.slane %v29, %v37
    %v39 = vlaneseq
    %v40 = vshrl.u32 %v39, 7
    %v41 = vsub.s32 2, %v40
    %v42 = vrot.slane %v29, %v41
    %v43 = vlaneseq
    %v44 = vshrl.u32 %v43, 7
    %v45 = vsub.s32 3, %v44
    %v46 = vrot.slane %v29, %v45
    %v47 = vlaneseq
    %v48 = vshrl.u32 %v47, 7
    %v49 = vsub.s32 4, %v48
    %v50 = vrot.slane %v29, %v49
    %v51 = vlaneseq
    %v52 = vshrl.u32 %v51, 7
    %v53 = vsub.s32 5, %v52
    %v54 = vrot.slane %v29, %v53
    %v55 = vlaneseq
    %v56 = vshrl.u32 %v55, 7
    %v57 = vsub.s32 6, %v56
    %v58 = vrot.slane %v29, %v57
    %v59 = vlaneseq
    %v60 = vshrl.u32 %v59, 7
    %v61 = vsub.s32 7, %v60
    %v62 = vrot.slane %v29, %v61
    %71 = vrot.lane.b32.xlu0 %v34, 2
    %v72 = vpop.permute.xlu0 %71
    %73 = vrot.lane.b32.xlu0 %v38, 2
    %v74 = vpop.permute.xlu0 %73
    %75 = vrot.lane.b32.xlu0 %v42, 2
    %v76 = vpop.permute.xlu0 %75
    %77 = vrot.lane.b32.xlu0 %v46, 2
    %v78 = vpop.permute.xlu0 %77
    %79 = vrot.lane.b32.xlu0 %v50, 2
    %v80 = vpop.permute.xlu0 %79
    %81 = vrot.lane.b32.xlu0 %v54, 2
    %v82 = vpop.permute.xlu0 %81
    %83 = vrot.lane.b32.xlu0 %v58, 2
    %v84 = vpop.permute.xlu0 %83
    %85 = vrot.lane.b32.xlu0 %v62, 2
    %v86 = vpop.permute.xlu0 %85
    %v87 = vlaneseq
    %v88 = vand.u32 %v87, 127
    %vm89 = vcmp.lt.s32.totalorder %v88, 2
    %v90 = vsel %vm89, %v84, %v86
    %v91 = vsel %vm89, %v82, %v84
    %v92 = vsel %vm89, %v80, %v82
    %v93 = vsel %vm89, %v78, %v80
    %v94 = vsel %vm89, %v76, %v78
    %v95 = vsel %vm89, %v74, %v76
    %v96 = vsel %vm89, %v72, %v74
    %v97 = vsel %vm89, %v86, %v72
    %v106 = vcombine.low %v97, %v96
    %v107 = vcombine.low %v95, %v94
    %v108 = vcombine.low %v93, %v92
    %v109 = vcombine.low %v91, %v90
    %v111 = vunpack.c.l.s4 1966171168
    %v112 = vunpack.c.0.s8 %v111
    %v113 = vlaneseq
    %v114 = vshrl.u32 %v113, 7
    %v115 = vsub.s32 %v112, %v114
    %v116 = vrot.slane %v106, %v115
    %v118 = vunpack.c.l.s4 1966171168
    %v119 = vunpack.c.0.s8 %v118
    %v120 = vlaneseq
    %v121 = vshrl.u32 %v120, 7
    %v122 = vsub.s32 %v119, %v121
    %v123 = vrot.slane %v107, %v122
    %v125 = vunpack.c.l.s4 1966171168
    %v126 = vunpack.c.0.s8 %v125
    %v127 = vlaneseq
    %v128 = vshrl.u32 %v127, 7
    %v129 = vsub.s32 %v126, %v128
    %v130 = vrot.slane %v108, %v129
    %v132 = vunpack.c.l.s4 1966171168
    %v133 = vunpack.c.0.s8 %v132
    %v134 = vlaneseq
    %v135 = vshrl.u32 %v134, 7
    %v136 = vsub.s32 %v133, %v135
    %v137 = vrot.slane %v109, %v136
    %v138 = vcombine.low %v116, %v123
    %v139 = vcombine.low %v130, %v137
    %v141 = vunpack.c.l.s4 1966171168
    %v142 = vunpack.c.0.s8 %v141
    %v143 = vlaneseq
    %v144 = vshrl.u32 %v143, 7
    %v145 = vsub.s32 %v142, %v144
    %v146 = vrot.slane %v138, %v145
    %v148 = vunpack.c.l.s4 1966171168
    %v149 = vunpack.c.0.s8 %v148
    %v150 = vlaneseq
    %v151 = vshrl.u32 %v150, 7
    %v152 = vsub.s32 %v149, %v151
    %v153 = vrot.slane %v139, %v152
    %v154 = vcombine.low %v146, %v153
    %156 = vst [vmem:[#allocation2] ss:$8 sm:$0xf] %v154
    %157 = vst [vmem:[#allocation2] ss:$8 sm:$0xf0] %v154
    %158 = vrot.lane.b32.xlu0 %v34, 1
    %v159 = vpop.permute.xlu0 %158
    %160 = vrot.lane.b32.xlu0 %v38, 1
    %v161 = vpop.permute.xlu0 %160
    %162 = vrot.lane.b32.xlu0 %v42, 1
    %v163 = vpop.permute.xlu0 %162
    %164 = vrot.lane.b32.xlu0 %v46, 1
    %v165 = vpop.permute.xlu0 %164
    %166 = vrot.lane.b32.xlu0 %v50, 1
    %v167 = vpop.permute.xlu0 %166
    %168 = vrot.lane.b32.xlu0 %v54, 1
    %v169 = vpop.permute.xlu0 %168
    %170 = vrot.lane.b32.xlu0 %v58, 1
    %v171 = vpop.permute.xlu0 %170
    %172 = vrot.lane.b32.xlu0 %v62, 1
    %v173 = vpop.permute.xlu0 %172
    %vm174 = vcmp.lt.s32.totalorder %v88, 1
    %v175 = vsel %vm174, %v171, %v173
    %v176 = vsel %vm174, %v169, %v171
    %v177 = vsel %vm174, %v167, %v169
    %v178 = vsel %vm174, %v165, %v167
    %v179 = vsel %vm174, %v163, %v165
    %v180 = vsel %vm174, %v161, %v163
    %v181 = vsel %vm174, %v159, %v161
    %v182 = vsel %vm174, %v173, %v159
    %v191 = vcombine.low %v182, %v181
    %v192 = vcombine.low %v180, %v179
    %v193 = vcombine.low %v178, %v177
    %v194 = vcombine.low %v176, %v175
    %v196 = vunpack.c.l.s4 1966171168
    %v197 = vunpack.c.0.s8 %v196
    %v198 = vlaneseq
    %v199 = vshrl.u32 %v198, 7
    %v200 = vsub.s32 %v197, %v199
    %v201 = vrot.slane %v191, %v200
    %v203 = vunpack.c.l.s4 1966171168
    %v204 = vunpack.c.0.s8 %v203
    %v205 = vlaneseq
    %v206 = vshrl.u32 %v205, 7
    %v207 = vsub.s32 %v204, %v206
    %v208 = vrot.slane %v192, %v207
    %v210 = vunpack.c.l.s4 1966171168
    %v211 = vunpack.c.0.s8 %v210
    %v212 = vlaneseq
    %v213 = vshrl.u32 %v212, 7
    %v214 = vsub.s32 %v211, %v213
    %v215 = vrot.slane %v193, %v214
    %v217 = vunpack.c.l.s4 1966171168
    %v218 = vunpack.c.0.s8 %v217
    %v219 = vlaneseq
    %v220 = vshrl.u32 %v219, 7
    %v221 = vsub.s32 %v218, %v220
    %v222 = vrot.slane %v194, %v221
    %v223 = vcombine.low %v201, %v208
    %v224 = vcombine.low %v215, %v222
    %v226 = vunpack.c.l.s4 1966171168
    %v227 = vunpack.c.0.s8 %v226
    %v228 = vlaneseq
    %v229 = vshrl.u32 %v228, 7
    %v230 = vsub.s32 %v227, %v229
    %v231 = vrot.slane %v223, %v230
    %v233 = vunpack.c.l.s4 1966171168
    %v234 = vunpack.c.0.s8 %v233
    %v235 = vlaneseq
    %v236 = vshrl.u32 %v235, 7
    %v237 = vsub.s32 %v234, %v236
    %v238 = vrot.slane %v224, %v237
    %v239 = vcombine.low %v231, %v238
    %s241 = scalar_lea.vmem [#allocation2], 1
    %242 = vst [vmem:[%s241] ss:$8 sm:$0xf] %v239
    %243 = vst [vmem:[%s241] ss:$8 sm:$0xf0] %v239
    %s244 = scalar_lea.vmem [#allocation2], 2
    %245 = vst [vmem:[%s244] ss:$8 sm:$0xf] %v29
    %246 = vst [vmem:[%s244] ss:$8 sm:$0xf0] %v29
    %247 = vrot.lane.b32.xlu0 %v34, 127
    %v248 = vpop.permute.xlu0 %247
    %249 = vrot.lane.b32.xlu0 %v38, 127
    %v250 = vpop.permute.xlu0 %249
    %251 = vrot.lane.b32.xlu0 %v42, 127
    %v252 = vpop.permute.xlu0 %251
    %253 = vrot.lane.b32.xlu0 %v46, 127
    %v254 = vpop.permute.xlu0 %253
    %255 = vrot.lane.b32.xlu0 %v50, 127
    %v256 = vpop.permute.xlu0 %255
    %257 = vrot.lane.b32.xlu0 %v54, 127
    %v258 = vpop.permute.xlu0 %257
    %259 = vrot.lane.b32.xlu0 %v58, 127
    %v260 = vpop.permute.xlu0 %259
    %261 = vrot.lane.b32.xlu0 %v62, 127
    %v262 = vpop.permute.xlu0 %261
    %vm263 = vcmp.lt.s32.totalorder %v88, 127
    %v264 = vsel %vm263, %v260, %v262
    %v265 = vsel %vm263, %v258, %v260
    %v266 = vsel %vm263, %v256, %v258
    %v267 = vsel %vm263, %v254, %v256
    %v268 = vsel %vm263, %v252, %v254
    %v269 = vsel %vm263, %v250, %v252
    %v270 = vsel %vm263, %v248, %v250
    %v271 = vsel %vm263, %v262, %v248
    %v280 = vcombine.low %v270, %v269
    %v281 = vcombine.low %v268, %v267
    %v282 = vcombine.low %v266, %v265
    %v283 = vcombine.low %v264, %v271
    %v285 = vunpack.c.l.s4 1966171168
    %v286 = vunpack.c.0.s8 %v285
    %v287 = vlaneseq
    %v288 = vshrl.u32 %v287, 7
    %v289 = vsub.s32 %v286, %v288
    %v290 = vrot.slane %v280, %v289
    %v292 = vunpack.c.l.s4 1966171168
    %v293 = vunpack.c.0.s8 %v292
    %v294 = vlaneseq
    %v295 = vshrl.u32 %v294, 7
    %v296 = vsub.s32 %v293, %v295
    %v297 = vrot.slane %v281, %v296
    %v299 = vunpack.c.l.s4 1966171168
    %v300 = vunpack.c.0.s8 %v299
    %v301 = vlaneseq
    %v302 = vshrl.u32 %v301, 7
    %v303 = vsub.s32 %v300, %v302
    %v304 = vrot.slane %v282, %v303
    %v306 = vunpack.c.l.s4 1966171168
    %v307 = vunpack.c.0.s8 %v306
    %v308 = vlaneseq
    %v309 = vshrl.u32 %v308, 7
    %v310 = vsub.s32 %v307, %v309
    %v311 = vrot.slane %v283, %v310
    %v312 = vcombine.low %v290, %v297
    %v313 = vcombine.low %v304, %v311
    %v315 = vunpack.c.l.s4 1966171168
    %v316 = vunpack.c.0.s8 %v315
    %v317 = vlaneseq
    %v318 = vshrl.u32 %v317, 7
    %v319 = vsub.s32 %v316, %v318
    %v320 = vrot.slane %v312, %v319
    %v322 = vunpack.c.l.s4 1966171168
    %v323 = vunpack.c.0.s8 %v322
    %v324 = vlaneseq
    %v325 = vshrl.u32 %v324, 7
    %v326 = vsub.s32 %v323, %v325
    %v327 = vrot.slane %v313, %v326
    %v328 = vcombine.low %v320, %v327
    %s330 = scalar_lea.vmem [#allocation2], 3
    %331 = vst [vmem:[%s330] ss:$8 sm:$0xf] %v328
    %332 = vst [vmem:[%s330] ss:$8 sm:$0xf0] %v328
    %333 = vrot.lane.b32.xlu0 %v34, 126
    %v334 = vpop.permute.xlu0 %333
    %335 = vrot.lane.b32.xlu0 %v38, 126
    %v336 = vpop.permute.xlu0 %335
    %337 = vrot.lane.b32.xlu0 %v42, 126
    %v338 = vpop.permute.xlu0 %337
    %339 = vrot.lane.b32.xlu0 %v46, 126
    %v340 = vpop.permute.xlu0 %339
    %341 = vrot.lane.b32.xlu0 %v50, 126
    %v342 = vpop.permute.xlu0 %341
    %343 = vrot.lane.b32.xlu0 %v54, 126
    %v344 = vpop.permute.xlu0 %343
    %345 = vrot.lane.b32.xlu0 %v58, 126
    %v346 = vpop.permute.xlu0 %345
    %347 = vrot.lane.b32.xlu0 %v62, 126
    %v348 = vpop.permute.xlu0 %347
    %vm349 = vcmp.lt.s32.totalorder %v88, 126
    %v350 = vsel %vm349, %v346, %v348
    %v351 = vsel %vm349, %v344, %v346
    %v352 = vsel %vm349, %v342, %v344
    %v353 = vsel %vm349, %v340, %v342
    %v354 = vsel %vm349, %v338, %v340
    %v355 = vsel %vm349, %v336, %v338
    %v356 = vsel %vm349, %v334, %v336
    %v357 = vsel %vm349, %v348, %v334
    %v366 = vcombine.low %v356, %v355
    %v367 = vcombine.low %v354, %v353
    %v368 = vcombine.low %v352, %v351
    %v369 = vcombine.low %v350, %v357
    %v371 = vunpack.c.l.s4 1966171168
    %v372 = vunpack.c.0.s8 %v371
    %v373 = vlaneseq
    %v374 = vshrl.u32 %v373, 7
    %v375 = vsub.s32 %v372, %v374
    %v376 = vrot.slane %v366, %v375
    %v378 = vunpack.c.l.s4 1966171168
    %v379 = vunpack.c.0.s8 %v378
    %v380 = vlaneseq
    %v381 = vshrl.u32 %v380, 7
    %v382 = vsub.s32 %v379, %v381
    %v383 = vrot.slane %v367, %v382
    %v385 = vunpack.c.l.s4 1966171168
    %v386 = vunpack.c.0.s8 %v385
    %v387 = vlaneseq
    %v388 = vshrl.u32 %v387, 7
    %v389 = vsub.s32 %v386, %v388
    %v390 = vrot.slane %v368, %v389
    %v392 = vunpack.c.l.s4 1966171168
    %v393 = vunpack.c.0.s8 %v392
    %v394 = vlaneseq
    %v395 = vshrl.u32 %v394, 7
    %v396 = vsub.s32 %v393, %v395
    %v397 = vrot.slane %v369, %v396
    %v398 = vcombine.low %v376, %v383
    %v399 = vcombine.low %v390, %v397
    %v401 = vunpack.c.l.s4 1966171168
    %v402 = vunpack.c.0.s8 %v401
    %v403 = vlaneseq
    %v404 = vshrl.u32 %v403, 7
    %v405 = vsub.s32 %v402, %v404
    %v406 = vrot.slane %v398, %v405
    %v408 = vunpack.c.l.s4 1966171168
    %v409 = vunpack.c.0.s8 %v408
    %v410 = vlaneseq
    %v411 = vshrl.u32 %v410, 7
    %v412 = vsub.s32 %v409, %v411
    %v413 = vrot.slane %v399, %v412
    %v414 = vcombine.low %v406, %v413
    %s416 = scalar_lea.vmem [#allocation2], 4
    %417 = vst [vmem:[%s416] ss:$8 sm:$0xf] %v414
    %418 = vst [vmem:[%s416] ss:$8 sm:$0xf0] %v414
    %v419 = vld [vmem:[%s2] sm:$0xff]
    %v420 = vld [vmem:[#allocation2] sm:$0x1f]
    %v421 = vld [vmem:[#allocation2 + $0x8] sm:$0x1f]
    %v422 = vld [vmem:[#allocation2 + $0x10] sm:$0x1f]
    %v423 = vld [vmem:[#allocation2 + $0x18] sm:$0x1f]
    %v424 = vld [vmem:[#allocation2 + $0x20] sm:$0x1f]
    %v425 = vld [vmem:[#allocation2 + $0x28] sm:$0x1f]
    %v426 = vld [vmem:[#allocation2 + $0x30] sm:$0x1f]
    %v427 = vld [vmem:[#allocation2 + $0x38] sm:$0x1f]
    %vm428 = vcmask 39936
    %v430 = vsel %vm428, %v419, 0
    %vm432 = vcmask 1044480
    %v434 = vsel %vm432, %v420, 0
    %v437 = vsel %vm432, %v421, 0
    %v440 = vsel %vm432, %v422, 0
    %v443 = vsel %vm432, %v423, 0
    %v446 = vsel %vm432, %v424, 0
    %v449 = vsel %vm432, %v425, 0
    %v452 = vsel %vm432, %v426, 0
    %v455 = vsel %vm432, %v427, 0
    %457 = vmatprep.subr.mxu0 0.0
    %458 = vmatpush1.msra.mxu0 0.0
    %459 = vmatprep.subr.mxu0 0.0
    %460 = vmatpush1.msra.mxu0 0.0
    %461 = vmatprep.subr.mxu0 0.0
    %462 = vmatpush1.msra.mxu0 0.0
    %463 = vmatprep.subr.mxu0 0.0
    %464 = vmatpush1.msra.mxu0 0.0
    %465 = vmatprep.subr.mxu0 0.0
    %466 = vmatpush1.msra.mxu0 0.0
    %467 = vmatprep.subr.mxu0 0.0
    %468 = vmatpush1.msra.mxu0 0.0
    %469 = vmatprep.subr.mxu0 0.0
    %470 = vmatpush1.msra.mxu0 0.0
    %471 = vmatprep.subr.mxu0 0.0
    %472 = vmatpush1.msra.mxu0 0.0
    %473 = vmatprep.subr.mxu0 0.0
    %474 = vmatpush1.msra.mxu0 0.0
    %475 = vmatprep.subr.mxu0 0.0
    %476 = vmatpush1.msra.mxu0 0.0
    %477 = vmatprep.subr.mxu0 0.0
    %478 = vmatpush1.msra.mxu0 0.0
    %479 = vmatprep.subr.mxu0 0.0
    %480 = vmatpush1.msra.mxu0 0.0
    %481 = vmatprep.subr.mxu0 0.0
    %482 = vmatpush1.msra.mxu0 0.0
    %483 = vmatprep.subr.mxu0 0.0
    %484 = vmatpush1.msra.mxu0 0.0
    %485 = vmatprep.subr.mxu0 0.0
    %486 = vmatpush1.msra.mxu0 0.0
    %487 = vmatprep.subr.mxu0 %v437
    %488 = vmatpush1.msra.mxu0 %v434
    %489 = vmatprep.subr.mxu0 0.0
    %490 = vmatpush2.msra.mxu0 0.0
    %491 = vmatprep.subr.mxu0 0.0
    %492 = vmatpush2.msra.mxu0 0.0
    %493 = vmatprep.subr.mxu0 0.0
    %494 = vmatpush2.msra.mxu0 0.0
    %495 = vmatprep.subr.mxu0 0.0
    %496 = vmatpush2.msra.mxu0 0.0
    %497 = vmatprep.subr.mxu0 0.0
    %498 = vmatpush2.msra.mxu0 0.0
    %499 = vmatprep.subr.mxu0 0.0
    %500 = vmatpush2.msra.mxu0 0.0
    %501 = vmatprep.subr.mxu0 0.0
    %502 = vmatpush2.msra.mxu0 0.0
    %503 = vmatprep.subr.mxu0 0.0
    %504 = vmatpush2.msra.mxu0 0.0
    %505 = vmatprep.subr.mxu0 0.0
    %506 = vmatpush2.msra.mxu0 0.0
    %507 = vmatprep.subr.mxu0 0.0
    %508 = vmatpush2.msra.mxu0 0.0
    %509 = vmatprep.subr.mxu0 0.0
    %510 = vmatpush2.msra.mxu0 0.0
    %511 = vmatprep.subr.mxu0 0.0
    %512 = vmatpush2.msra.mxu0 0.0
    %513 = vmatprep.subr.mxu0 0.0
    %514 = vmatpush2.msra.mxu0 0.0
    %515 = vmatprep.subr.mxu0 0.0
    %516 = vmatpush2.msra.mxu0 0.0
    %517 = vmatprep.subr.mxu0 0.0
    %518 = vmatpush2.msra.mxu0 0.0
    %519 = vmatprep.subr.mxu0 0.0
    %520 = vmatpush2.msra.mxu0 0.0
    %521 = vmatprep.mubr.f32.mxu0 0.0
    %522 = vmatmul.mubr.f32.gmra.mxu0 %v430
    %v523 = vpop.f32.mrf.mxu0
    %v524 = vadd.f32 0.0, %v523
    %v525 = vpop.f32.mrf.mxu0
    %v526 = vadd.f32 0.0, %v525
    %527 = vdwg.mxu0
    %528 = vmatprep.subr.mxu0 0.0
    %529 = vmatpush1.msra.mxu0 0.0
    %530 = vmatprep.subr.mxu0 0.0
    %531 = vmatpush1.msra.mxu0 0.0
    %532 = vmatprep.subr.mxu0 0.0
    %533 = vmatpush1.msra.mxu0 0.0
    %534 = vmatprep.subr.mxu0 0.0
    %535 = vmatpush1.msra.mxu0 0.0
    %536 = vmatprep.subr.mxu0 0.0
    %537 = vmatpush1.msra.mxu0 0.0
    %538 = vmatprep.subr.mxu0 0.0
    %539 = vmatpush1.msra.mxu0 0.0
    %540 = vmatprep.subr.mxu0 0.0
    %541 = vmatpush1.msra.mxu0 0.0
    %542 = vmatprep.subr.mxu0 0.0
    %543 = vmatpush1.msra.mxu0 0.0
    %544 = vmatprep.subr.mxu0 0.0
    %545 = vmatpush1.msra.mxu0 0.0
    %546 = vmatprep.subr.mxu0 0.0
    %547 = vmatpush1.msra.mxu0 0.0
    %548 = vmatprep.subr.mxu0 0.0
    %549 = vmatpush1.msra.mxu0 0.0
    %550 = vmatprep.subr.mxu0 0.0
    %551 = vmatpush1.msra.mxu0 0.0
    %552 = vmatprep.subr.mxu0 0.0
    %553 = vmatpush1.msra.mxu0 0.0
    %554 = vmatprep.subr.mxu0 0.0
    %555 = vmatpush1.msra.mxu0 0.0
    %556 = vmatprep.subr.mxu0 0.0
    %557 = vmatpush1.msra.mxu0 0.0
    %558 = vmatprep.subr.mxu0 %v443
    %559 = vmatpush1.msra.mxu0 %v440
    %560 = vmatprep.subr.mxu0 0.0
    %561 = vmatpush2.msra.mxu0 0.0
    %562 = vmatprep.subr.mxu0 0.0
    %563 = vmatpush2.msra.mxu0 0.0
    %564 = vmatprep.subr.mxu0 0.0
    %565 = vmatpush2.msra.mxu0 0.0
    %566 = vmatprep.subr.mxu0 0.0
    %567 = vmatpush2.msra.mxu0 0.0
    %568 = vmatprep.subr.mxu0 0.0
    %569 = vmatpush2.msra.mxu0 0.0
    %570 = vmatprep.subr.mxu0 0.0
    %571 = vmatpush2.msra.mxu0 0.0
    %572 = vmatprep.subr.mxu0 0.0
    %573 = vmatpush2.msra.mxu0 0.0
    %574 = vmatprep.subr.mxu0 0.0
    %575 = vmatpush2.msra.mxu0 0.0
    %576 = vmatprep.subr.mxu0 0.0
    %577 = vmatpush2.msra.mxu0 0.0
    %578 = vmatprep.subr.mxu0 0.0
    %579 = vmatpush2.msra.mxu0 0.0
    %580 = vmatprep.subr.mxu0 0.0
    %581 = vmatpush2.msra.mxu0 0.0
    %582 = vmatprep.subr.mxu0 0.0
    %583 = vmatpush2.msra.mxu0 0.0
    %584 = vmatprep.subr.mxu0 0.0
    %585 = vmatpush2.msra.mxu0 0.0
    %586 = vmatprep.subr.mxu0 0.0
    %587 = vmatpush2.msra.mxu0 0.0
    %588 = vmatprep.subr.mxu0 0.0
    %589 = vmatpush2.msra.mxu0 0.0
    %590 = vmatprep.subr.mxu0 0.0
    %591 = vmatpush2.msra.mxu0 0.0
    %592 = vmatprep.mubr.f32.mxu0 0.0
    %593 = vmatmul.mubr.f32.gmra.mxu0 %v430
    %v594 = vpop.f32.mrf.mxu0
    %v595 = vadd.f32 0.0, %v594
    %v596 = vpop.f32.mrf.mxu0
    %v597 = vadd.f32 0.0, %v596
    %598 = vdwg.mxu0
    %599 = vmatprep.subr.mxu0 0.0
    %600 = vmatpush1.msra.mxu0 0.0
    %601 = vmatprep.subr.mxu0 0.0
    %602 = vmatpush1.msra.mxu0 0.0
    %603 = vmatprep.subr.mxu0 0.0
    %604 = vmatpush1.msra.mxu0 0.0
    %605 = vmatprep.subr.mxu0 0.0
    %606 = vmatpush1.msra.mxu0 0.0
    %607 = vmatprep.subr.mxu0 0.0
    %608 = vmatpush1.msra.mxu0 0.0
    %609 = vmatprep.subr.mxu0 0.0
    %610 = vmatpush1.msra.mxu0 0.0
    %611 = vmatprep.subr.mxu0 0.0
    %612 = vmatpush1.msra.mxu0 0.0
    %613 = vmatprep.subr.mxu0 0.0
    %614 = vmatpush1.msra.mxu0 0.0
    %615 = vmatprep.subr.mxu0 0.0
    %616 = vmatpush1.msra.mxu0 0.0
    %617 = vmatprep.subr.mxu0 0.0
    %618 = vmatpush1.msra.mxu0 0.0
    %619 = vmatprep.subr.mxu0 0.0
    %620 = vmatpush1.msra.mxu0 0.0
    %621 = vmatprep.subr.mxu0 0.0
    %622 = vmatpush1.msra.mxu0 0.0
    %623 = vmatprep.subr.mxu0 0.0
    %624 = vmatpush1.msra.mxu0 0.0
    %625 = vmatprep.subr.mxu0 0.0
    %626 = vmatpush1.msra.mxu0 0.0
    %627 = vmatprep.subr.mxu0 0.0
    %628 = vmatpush1.msra.mxu0 0.0
    %629 = vmatprep.subr.mxu0 %v449
    %630 = vmatpush1.msra.mxu0 %v446
    %631 = vmatprep.subr.mxu0 0.0
    %632 = vmatpush2.msra.mxu0 0.0
    %633 = vmatprep.subr.mxu0 0.0
    %634 = vmatpush2.msra.mxu0 0.0
    %635 = vmatprep.subr.mxu0 0.0
    %636 = vmatpush2.msra.mxu0 0.0
    %637 = vmatprep.subr.mxu0 0.0
    %638 = vmatpush2.msra.mxu0 0.0
    %639 = vmatprep.subr.mxu0 0.0
    %640 = vmatpush2.msra.mxu0 0.0
    %641 = vmatprep.subr.mxu0 0.0
    %642 = vmatpush2.msra.mxu0 0.0
    %643 = vmatprep.subr.mxu0 0.0
    %644 = vmatpush2.msra.mxu0 0.0
    %645 = vmatprep.subr.mxu0 0.0
    %646 = vmatpush2.msra.mxu0 0.0
    %647 = vmatprep.subr.mxu0 0.0
    %648 = vmatpush2.msra.mxu0 0.0
    %649 = vmatprep.subr.mxu0 0.0
    %650 = vmatpush2.msra.mxu0 0.0
    %651 = vmatprep.subr.mxu0 0.0
    %652 = vmatpush2.msra.mxu0 0.0
    %653 = vmatprep.subr.mxu0 0.0
    %654 = vmatpush2.msra.mxu0 0.0
    %655 = vmatprep.subr.mxu0 0.0
    %656 = vmatpush2.msra.mxu0 0.0
    %657 = vmatprep.subr.mxu0 0.0
    %658 = vmatpush2.msra.mxu0 0.0
    %659 = vmatprep.subr.mxu0 0.0
    %660 = vmatpush2.msra.mxu0 0.0
    %661 = vmatprep.subr.mxu0 0.0
    %662 = vmatpush2.msra.mxu0 0.0
    %663 = vmatprep.mubr.f32.mxu0 0.0
    %664 = vmatmul.mubr.f32.gmra.mxu0 %v430
    %v665 = vpop.f32.mrf.mxu0
    %v666 = vadd.f32 0.0, %v665
    %v667 = vpop.f32.mrf.mxu0
    %v668 = vadd.f32 0.0, %v667
    %669 = vdwg.mxu0
    %670 = vmatprep.subr.mxu0 0.0
    %671 = vmatpush1.msra.mxu0 0.0
    %672 = vmatprep.subr.mxu0 0.0
    %673 = vmatpush1.msra.mxu0 0.0
    %674 = vmatprep.subr.mxu0 0.0
    %675 = vmatpush1.msra.mxu0 0.0
    %676 = vmatprep.subr.mxu0 0.0
    %677 = vmatpush1.msra.mxu0 0.0
    %678 = vmatprep.subr.mxu0 0.0
    %679 = vmatpush1.msra.mxu0 0.0
    %680 = vmatprep.subr.mxu0 0.0
    %681 = vmatpush1.msra.mxu0 0.0
    %682 = vmatprep.subr.mxu0 0.0
    %683 = vmatpush1.msra.mxu0 0.0
    %684 = vmatprep.subr.mxu0 0.0
    %685 = vmatpush1.msra.mxu0 0.0
    %686 = vmatprep.subr.mxu0 0.0
    %687 = vmatpush1.msra.mxu0 0.0
    %688 = vmatprep.subr.mxu0 0.0
    %689 = vmatpush1.msra.mxu0 0.0
    %690 = vmatprep.subr.mxu0 0.0
    %691 = vmatpush1.msra.mxu0 0.0
    %692 = vmatprep.subr.mxu0 0.0
    %693 = vmatpush1.msra.mxu0 0.0
    %694 = vmatprep.subr.mxu0 0.0
    %695 = vmatpush1.msra.mxu0 0.0
    %696 = vmatprep.subr.mxu0 0.0
    %697 = vmatpush1.msra.mxu0 0.0
    %698 = vmatprep.subr.mxu0 0.0
    %699 = vmatpush1.msra.mxu0 0.0
    %700 = vmatprep.subr.mxu0 %v455
    %701 = vmatpush1.msra.mxu0 %v452
    %702 = vmatprep.subr.mxu0 0.0
    %703 = vmatpush2.msra.mxu0 0.0
    %704 = vmatprep.subr.mxu0 0.0
    %705 = vmatpush2.msra.mxu0 0.0
    %706 = vmatprep.subr.mxu0 0.0
    %707 = vmatpush2.msra.mxu0 0.0
    %708 = vmatprep.subr.mxu0 0.0
    %709 = vmatpush2.msra.mxu0 0.0
    %710 = vmatprep.subr.mxu0 0.0
    %711 = vmatpush2.msra.mxu0 0.0
    %712 = vmatprep.subr.mxu0 0.0
    %713 = vmatpush2.msra.mxu0 0.0
    %714 = vmatprep.subr.mxu0 0.0
    %715 = vmatpush2.msra.mxu0 0.0
    %716 = vmatprep.subr.mxu0 0.0
    %717 = vmatpush2.msra.mxu0 0.0
    %718 = vmatprep.subr.mxu0 0.0
    %719 = vmatpush2.msra.mxu0 0.0
    %720 = vmatprep.subr.mxu0 0.0
    %721 = vmatpush2.msra.mxu0 0.0
    %722 = vmatprep.subr.mxu0 0.0
    %723 = vmatpush2.msra.mxu0 0.0
    %724 = vmatprep.subr.mxu0 0.0
    %725 = vmatpush2.msra.mxu0 0.0
    %726 = vmatprep.subr.mxu0 0.0
    %727 = vmatpush2.msra.mxu0 0.0
    %728 = vmatprep.subr.mxu0 0.0
    %729 = vmatpush2.msra.mxu0 0.0
    %730 = vmatprep.subr.mxu0 0.0
    %731 = vmatpush2.msra.mxu0 0.0
    %732 = vmatprep.subr.mxu0 0.0
    %733 = vmatpush2.msra.mxu0 0.0
    %734 = vmatprep.mubr.f32.mxu0 0.0
    %735 = vmatmul.mubr.f32.gmra.mxu0 %v430
    %v736 = vpop.f32.mrf.mxu0
    %v737 = vadd.f32 0.0, %v736
    %v738 = vpop.f32.mrf.mxu0
    %v739 = vadd.f32 0.0, %v738
    %740 = vdwg.mxu0
    %v741 = vmul.f32 %v524, %v524
    %v742 = vmul.f32 %v526, %v526
    %v743 = vmul.f32 %v595, %v595
    %v744 = vmul.f32 %v597, %v597
    %v745 = vmul.f32 %v666, %v666
    %v746 = vmul.f32 %v668, %v668
    %v747 = vmul.f32 %v737, %v737
    %v748 = vmul.f32 %v739, %v739
    %v749 = vrot.slane %v741, 7
    %v750 = vrot.slane %v742, 7
    %v751 = vrot.slane %v743, 7
    %v752 = vrot.slane %v744, 7
    %v753 = vrot.slane %v745, 7
    %v754 = vrot.slane %v746, 7
    %v755 = vrot.slane %v747, 7
    %v756 = vrot.slane %v748, 7
    %v757 = vlaneseq
    %v758 = vshrl.u32 %v757, 7
    %vm759 = vcmp.eq.s32.totalorder %v758, 0
    %v760 = vsel %vm759, 0.0, %v749
    %v761 = vsel %vm759, 0.0, %v750
    %v762 = vsel %vm759, 0.0, %v751
    %v763 = vsel %vm759, 0.0, %v752
    %v764 = vsel %vm759, 0.0, %v753
    %v765 = vsel %vm759, 0.0, %v754
    %v766 = vsel %vm759, 0.0, %v755
    %v767 = vsel %vm759, 0.0, %v756
    %v768 = vadd.f32 %v741, %v760
    %v769 = vadd.f32 %v742, %v761
    %v770 = vadd.f32 %v743, %v762
    %v771 = vadd.f32 %v744, %v763
    %v772 = vadd.f32 %v745, %v764
    %v773 = vadd.f32 %v746, %v765
    %v774 = vadd.f32 %v747, %v766
    %v775 = vadd.f32 %v748, %v767
    %v776 = vmul.f32 %v768, 5e-05
    %v777 = vmul.f32 %v769, 5e-05
    %v778 = vmul.f32 %v770, 5e-05
    %v779 = vmul.f32 %v771, 5e-05
    %v780 = vmul.f32 %v772, 5e-05
    %v781 = vmul.f32 %v773, 5e-05
    %v782 = vmul.f32 %v774, 5e-05
    %v783 = vmul.f32 %v775, 5e-05
    %v784 = vadd.f32 %v776, 1.0
    %v785 = vadd.f32 %v777, 1.0
    %v786 = vadd.f32 %v778, 1.0
    %v787 = vadd.f32 %v779, 1.0
    %v788 = vadd.f32 %v780, 1.0
    %v789 = vadd.f32 %v781, 1.0
    %v790 = vadd.f32 %v782, 1.0
    %v791 = vadd.f32 %v783, 1.0
    %v792 = vrsqrt.pop %v784
    %v793 = vrsqrt.pop %v785
    %v794 = vrsqrt.pop %v786
    %v795 = vrsqrt.pop %v787
    %v796 = vrsqrt.pop %v788
    %v797 = vrsqrt.pop %v789
    %v798 = vrsqrt.pop %v790
    %v799 = vrsqrt.pop %v791
    %v800 = vrsqrt.pop %v792
    %v801 = vmul.f32 %v792, %v800
    %vm802 = vcmp.eq.f32.partialorder %v792, inf
    %v803 = vsel %vm802, %v792, %v801
    %vm804 = vcmp.eq.f32.partialorder %v792, 0.0
    %v805 = vand.u32 %v792, 2147483648
    %v806 = vsel %vm804, %v805, %v803
    %v807 = vrsqrt.pop %v793
    %v808 = vmul.f32 %v793, %v807
    %vm809 = vcmp.eq.f32.partialorder %v793, inf
    %v810 = vsel %vm809, %v793, %v808
    %vm811 = vcmp.eq.f32.partialorder %v793, 0.0
    %v812 = vand.u32 %v793, 2147483648
    %v813 = vsel %vm811, %v812, %v810
    %v814 = vrsqrt.pop %v794
    %v815 = vmul.f32 %v794, %v814
    %vm816 = vcmp.eq.f32.partialorder %v794, inf
    %v817 = vsel %vm816, %v794, %v815
    %vm818 = vcmp.eq.f32.partialorder %v794, 0.0
    %v819 = vand.u32 %v794, 2147483648
    %v820 = vsel %vm818, %v819, %v817
    %v821 = vrsqrt.pop %v795
    %v822 = vmul.f32 %v795, %v821
    %vm823 = vcmp.eq.f32.partialorder %v795, inf
    %v824 = vsel %vm823, %v795, %v822
    %vm825 = vcmp.eq.f32.partialorder %v795, 0.0
    %v826 = vand.u32 %v795, 2147483648
    %v827 = vsel %vm825, %v826, %v824
    %v828 = vrsqrt.pop %v796
    %v829 = vmul.f32 %v796, %v828
    %vm830 = vcmp.eq.f32.partialorder %v796, inf
    %v831 = vsel %vm830, %v796, %v829
    %vm832 = vcmp.eq.f32.partialorder %v796, 0.0
    %v833 = vand.u32 %v796, 2147483648
    %v834 = vsel %vm832, %v833, %v831
    %v835 = vrsqrt.pop %v797
    %v836 = vmul.f32 %v797, %v835
    %vm837 = vcmp.eq.f32.partialorder %v797, inf
    %v838 = vsel %vm837, %v797, %v836
    %vm839 = vcmp.eq.f32.partialorder %v797, 0.0
    %v840 = vand.u32 %v797, 2147483648
    %v841 = vsel %vm839, %v840, %v838
    %v842 = vrsqrt.pop %v798
    %v843 = vmul.f32 %v798, %v842
    %vm844 = vcmp.eq.f32.partialorder %v798, inf
    %v845 = vsel %vm844, %v798, %v843
    %vm846 = vcmp.eq.f32.partialorder %v798, 0.0
    %v847 = vand.u32 %v798, 2147483648
    %v848 = vsel %vm846, %v847, %v845
    %v849 = vrsqrt.pop %v799
    %v850 = vmul.f32 %v799, %v849
    %vm851 = vcmp.eq.f32.partialorder %v799, inf
    %v852 = vsel %vm851, %v799, %v850
    %vm853 = vcmp.eq.f32.partialorder %v799, 0.0
    %v854 = vand.u32 %v799, 2147483648
    %v855 = vsel %vm853, %v854, %v852
    %v856 = vmul.f32 %v792, %v806
    %v857 = vmul.f32 %v793, %v813
    %v858 = vmul.f32 %v794, %v820
    %v859 = vmul.f32 %v795, %v827
    %v860 = vmul.f32 %v796, %v834
    %v861 = vmul.f32 %v797, %v841
    %v862 = vmul.f32 %v798, %v848
    %v863 = vmul.f32 %v799, %v855
    %v864 = vmul.f32 %v524, %v856
    %v865 = vmul.f32 %v526, %v857
    %v866 = vmul.f32 %v595, %v858
    %v867 = vmul.f32 %v597, %v859
    %v868 = vmul.f32 %v666, %v860
    %v869 = vmul.f32 %v668, %v861
    %v870 = vmul.f32 %v737, %v862
    %v871 = vmul.f32 %v739, %v863
    %v872 = vld [vmem:[#allocation4] sm:$0xff]
    %v874 = vlaneseq
    %v875 = vshrl.u32 %v874, 7
    %v876 = vsub.s32 0, %v875
    %v877 = vrot.slane %v872, %v876
    %v878 = vlaneseq
    %v879 = vshrl.u32 %v878, 7
    %v880 = vsub.s32 1, %v879
    %v881 = vrot.slane %v872, %v880
    %v882 = vlaneseq
    %v883 = vshrl.u32 %v882, 7
    %v884 = vsub.s32 2, %v883
    %v885 = vrot.slane %v872, %v884
    %v886 = vlaneseq
    %v887 = vshrl.u32 %v886, 7
    %v888 = vsub.s32 3, %v887
    %v889 = vrot.slane %v872, %v888
    %v890 = vlaneseq
    %v891 = vshrl.u32 %v890, 7
    %v892 = vsub.s32 4, %v891
    %v893 = vrot.slane %v872, %v892
    %v894 = vlaneseq
    %v895 = vshrl.u32 %v894, 7
    %v896 = vsub.s32 5, %v895
    %v897 = vrot.slane %v872, %v896
    %v898 = vlaneseq
    %v899 = vshrl.u32 %v898, 7
    %v900 = vsub.s32 6, %v899
    %v901 = vrot.slane %v872, %v900
    %v902 = vlaneseq
    %v903 = vshrl.u32 %v902, 7
    %v904 = vsub.s32 7, %v903
    %v905 = vrot.slane %v872, %v904
    %v914 = vmul.f32 %v864, %v877
    %v915 = vmul.f32 %v865, %v881
    %v916 = vmul.f32 %v866, %v885
    %v917 = vmul.f32 %v867, %v889
    %v918 = vmul.f32 %v868, %v893
    %v919 = vmul.f32 %v869, %v897
    %v920 = vmul.f32 %v870, %v901
    %v921 = vmul.f32 %v871, %v905
    %922 = vrot.lane.b32.xlu0 %v914, 6
    %v923 = vpop.permute.xlu0 %922
    %924 = vrot.lane.b32.xlu0 %v915, 6
    %v925 = vpop.permute.xlu0 %924
    %926 = vrot.lane.b32.xlu0 %v916, 6
    %v927 = vpop.permute.xlu0 %926
    %928 = vrot.lane.b32.xlu0 %v917, 6
    %v929 = vpop.permute.xlu0 %928
    %930 = vrot.lane.b32.xlu0 %v918, 6
    %v931 = vpop.permute.xlu0 %930
    %932 = vrot.lane.b32.xlu0 %v919, 6
    %v933 = vpop.permute.xlu0 %932
    %934 = vrot.lane.b32.xlu0 %v920, 6
    %v935 = vpop.permute.xlu0 %934
    %936 = vrot.lane.b32.xlu0 %v921, 6
    %v937 = vpop.permute.xlu0 %936
    %vm938 = vcmp.lt.s32.totalorder %v88, 6
    %v939 = vsel %vm938, %v935, %v937
    %v940 = vsel %vm938, %v933, %v935
    %v941 = vsel %vm938, %v931, %v933
    %v942 = vsel %vm938, %v929, %v931
    %v943 = vsel %vm938, %v927, %v929
    %v944 = vsel %vm938, %v925, %v927
    %v945 = vsel %vm938, %v923, %v925
    %v946 = vsel %vm938, %v937, %v923
    %947 = vst [vmem:[#allocation3] sm:$0xff] %v946
    %948 = vst [vmem:[#allocation3 + $0x8] sm:$0xff] %v945
    %949 = vst [vmem:[#allocation3 + $0x10] sm:$0xff] %v944
    %950 = vst [vmem:[#allocation3 + $0x18] sm:$0xff] %v943
    %951 = vst [vmem:[#allocation3 + $0x20] sm:$0xff] %v942
    %952 = vst [vmem:[#allocation3 + $0x28] sm:$0xff] %v941
    %953 = vst [vmem:[#allocation3 + $0x30] sm:$0xff] %v940
    %954 = vst [vmem:[#allocation3 + $0x38] sm:$0xff] %v939
    %955 = vrot.lane.b32.xlu0 %v914, 5
    %v956 = vpop.permute.xlu0 %955
    %957 = vrot.lane.b32.xlu0 %v915, 5
    %v958 = vpop.permute.xlu0 %957
    %959 = vrot.lane.b32.xlu0 %v916, 5
    %v960 = vpop.permute.xlu0 %959
    %961 = vrot.lane.b32.xlu0 %v917, 5
    %v962 = vpop.permute.xlu0 %961
    %963 = vrot.lane.b32.xlu0 %v918, 5
    %v964 = vpop.permute.xlu0 %963
    %965 = vrot.lane.b32.xlu0 %v919, 5
    %v966 = vpop.permute.xlu0 %965
    %967 = vrot.lane.b32.xlu0 %v920, 5
    %v968 = vpop.permute.xlu0 %967
    %969 = vrot.lane.b32.xlu0 %v921, 5
    %v970 = vpop.permute.xlu0 %969
    %vm971 = vcmp.lt.s32.totalorder %v88, 5
    %v972 = vsel %vm971, %v968, %v970
    %v973 = vsel %vm971, %v966, %v968
    %v974 = vsel %vm971, %v964, %v966
    %v975 = vsel %vm971, %v962, %v964
    %v976 = vsel %vm971, %v960, %v962
    %v977 = vsel %vm971, %v958, %v960
    %v978 = vsel %vm971, %v956, %v958
    %v979 = vsel %vm971, %v970, %v956
    %980 = vst [vmem:[#allocation3 + $0x40] sm:$0xff] %v979
    %981 = vst [vmem:[#allocation3 + $0x48] sm:$0xff] %v978
    %982 = vst [vmem:[#allocation3 + $0x50] sm:$0xff] %v977
    %983 = vst [vmem:[#allocation3 + $0x58] sm:$0xff] %v976
    %984 = vst [vmem:[#allocation3 + $0x60] sm:$0xff] %v975
    %985 = vst [vmem:[#allocation3 + $0x68] sm:$0xff] %v974
    %986 = vst [vmem:[#allocation3 + $0x70] sm:$0xff] %v973
    %987 = vst [vmem:[#allocation3 + $0x78] sm:$0xff] %v972
    %988 = vrot.lane.b32.xlu0 %v914, 4
    %v989 = vpop.permute.xlu0 %988
    %990 = vrot.lane.b32.xlu0 %v915, 4
    %v991 = vpop.permute.xlu0 %990
    %992 = vrot.lane.b32.xlu0 %v916, 4
    %v993 = vpop.permute.xlu0 %992
    %994 = vrot.lane.b32.xlu0 %v917, 4
    %v995 = vpop.permute.xlu0 %994
    %996 = vrot.lane.b32.xlu0 %v918, 4
    %v997 = vpop.permute.xlu0 %996
    %998 = vrot.lane.b32.xlu0 %v919, 4
    %v999 = vpop.permute.xlu0 %998
    %1000 = vrot.lane.b32.xlu0 %v920, 4
    %v1001 = vpop.permute.xlu0 %1000
    %1002 = vrot.lane.b32.xlu0 %v921, 4
    %v1003 = vpop.permute.xlu0 %1002
    %vm1004 = vcmp.lt.s32.totalorder %v88, 4
    %v1005 = vsel %vm1004, %v1001, %v1003
    %v1006 = vsel %vm1004, %v999, %v1001
    %v1007 = vsel %vm1004, %v997, %v999
    %v1008 = vsel %vm1004, %v995, %v997
    %v1009 = vsel %vm1004, %v993, %v995
    %v1010 = vsel %vm1004, %v991, %v993
    %v1011 = vsel %vm1004, %v989, %v991
    %v1012 = vsel %vm1004, %v1003, %v989
    %1013 = vst [vmem:[#allocation3 + $0x80] sm:$0xff] %v1012
    %1014 = vst [vmem:[#allocation3 + $0x88] sm:$0xff] %v1011
    %1015 = vst [vmem:[#allocation3 + $0x90] sm:$0xff] %v1010
    %1016 = vst [vmem:[#allocation3 + $0x98] sm:$0xff] %v1009
    %1017 = vst [vmem:[#allocation3 + $0xa0] sm:$0xff] %v1008
    %1018 = vst [vmem:[#allocation3 + $0xa8] sm:$0xff] %v1007
    %1019 = vst [vmem:[#allocation3 + $0xb0] sm:$0xff] %v1006
    %1020 = vst [vmem:[#allocation3 + $0xb8] sm:$0xff] %v1005
    %1021 = vrot.lane.b32.xlu0 %v914, 3
    %v1022 = vpop.permute.xlu0 %1021
    %1023 = vrot.lane.b32.xlu0 %v915, 3
    %v1024 = vpop.permute.xlu0 %1023
    %1025 = vrot.lane.b32.xlu0 %v916, 3
    %v1026 = vpop.permute.xlu0 %1025
    %1027 = vrot.lane.b32.xlu0 %v917, 3
    %v1028 = vpop.permute.xlu0 %1027
    %1029 = vrot.lane.b32.xlu0 %v918, 3
    %v1030 = vpop.permute.xlu0 %1029
    %1031 = vrot.lane.b32.xlu0 %v919, 3
    %v1032 = vpop.permute.xlu0 %1031
    %1033 = vrot.lane.b32.xlu0 %v920, 3
    %v1034 = vpop.permute.xlu0 %1033
    %1035 = vrot.lane.b32.xlu0 %v921, 3
    %v1036 = vpop.permute.xlu0 %1035
    %vm1037 = vcmp.lt.s32.totalorder %v88, 3
    %v1038 = vsel %vm1037, %v1034, %v1036
    %v1039 = vsel %vm1037, %v1032, %v1034
    %v1040 = vsel %vm1037, %v1030, %v1032
    %v1041 = vsel %vm1037, %v1028, %v1030
    %v1042 = vsel %vm1037, %v1026, %v1028
    %v1043 = vsel %vm1037, %v1024, %v1026
    %v1044 = vsel %vm1037, %v1022, %v1024
    %v1045 = vsel %vm1037, %v1036, %v1022
    %1046 = vst [vmem:[#allocation3 + $0xc0] sm:$0xff] %v1045
    %1047 = vst [vmem:[#allocation3 + $0xc8] sm:$0xff] %v1044
    %1048 = vst [vmem:[#allocation3 + $0xd0] sm:$0xff] %v1043
    %1049 = vst [vmem:[#allocation3 + $0xd8] sm:$0xff] %v1042
    %1050 = vst [vmem:[#allocation3 + $0xe0] sm:$0xff] %v1041
    %1051 = vst [vmem:[#allocation3 + $0xe8] sm:$0xff] %v1040
    %1052 = vst [vmem:[#allocation3 + $0xf0] sm:$0xff] %v1039
    %1053 = vst [vmem:[#allocation3 + $0xf8] sm:$0xff] %v1038
    %1054 = vrot.lane.b32.xlu0 %v914, 2
    %v1055 = vpop.permute.xlu0 %1054
    %1056 = vrot.lane.b32.xlu0 %v915, 2
    %v1057 = vpop.permute.xlu0 %1056
    %1058 = vrot.lane.b32.xlu0 %v916, 2
    %v1059 = vpop.permute.xlu0 %1058
    %1060 = vrot.lane.b32.xlu0 %v917, 2
    %v1061 = vpop.permute.xlu0 %1060
    %1062 = vrot.lane.b32.xlu0 %v918, 2
    %v1063 = vpop.permute.xlu0 %1062
    %1064 = vrot.lane.b32.xlu0 %v919, 2
    %v1065 = vpop.permute.xlu0 %1064
    %1066 = vrot.lane.b32.xlu0 %v920, 2
    %v1067 = vpop.permute.xlu0 %1066
    %1068 = vrot.lane.b32.xlu0 %v921, 2
    %v1069 = vpop.permute.xlu0 %1068
    %v1070 = vsel %vm89, %v1067, %v1069
    %v1071 = vsel %vm89, %v1065, %v1067
    %v1072 = vsel %vm89, %v1063, %v1065
    %v1073 = vsel %vm89, %v1061, %v1063
    %v1074 = vsel %vm89, %v1059, %v1061
    %v1075 = vsel %vm89, %v1057, %v1059
    %v1076 = vsel %vm89, %v1055, %v1057
    %v1077 = vsel %vm89, %v1069, %v1055
    %1078 = vst [vmem:[#allocation3 + $0x100] sm:$0xff] %v1077
    %1079 = vst [vmem:[#allocation3 + $0x108] sm:$0xff] %v1076
    %1080 = vst [vmem:[#allocation3 + $0x110] sm:$0xff] %v1075
    %1081 = vst [vmem:[#allocation3 + $0x118] sm:$0xff] %v1074
    %1082 = vst [vmem:[#allocation3 + $0x120] sm:$0xff] %v1073
    %1083 = vst [vmem:[#allocation3 + $0x128] sm:$0xff] %v1072
    %1084 = vst [vmem:[#allocation3 + $0x130] sm:$0xff] %v1071
    %1085 = vst [vmem:[#allocation3 + $0x138] sm:$0xff] %v1070
    %1086 = vrot.lane.b32.xlu0 %v914, 1
    %v1087 = vpop.permute.xlu0 %1086
    %1088 = vrot.lane.b32.xlu0 %v915, 1
    %v1089 = vpop.permute.xlu0 %1088
    %1090 = vrot.lane.b32.xlu0 %v916, 1
    %v1091 = vpop.permute.xlu0 %1090
    %1092 = vrot.lane.b32.xlu0 %v917, 1
    %v1093 = vpop.permute.xlu0 %1092
    %1094 = vrot.lane.b32.xlu0 %v918, 1
    %v1095 = vpop.permute.xlu0 %1094
    %1096 = vrot.lane.b32.xlu0 %v919, 1
    %v1097 = vpop.permute.xlu0 %1096
    %1098 = vrot.lane.b32.xlu0 %v920, 1
    %v1099 = vpop.permute.xlu0 %1098
    %1100 = vrot.lane.b32.xlu0 %v921, 1
    %v1101 = vpop.permute.xlu0 %1100
    %v1102 = vsel %vm174, %v1099, %v1101
    %v1103 = vsel %vm174, %v1097, %v1099
    %v1104 = vsel %vm174, %v1095, %v1097
    %v1105 = vsel %vm174, %v1093, %v1095
    %v1106 = vsel %vm174, %v1091, %v1093
    %v1107 = vsel %vm174, %v1089, %v1091
    %v1108 = vsel %vm174, %v1087, %v1089
    %v1109 = vsel %vm174, %v1101, %v1087
    %1110 = vst [vmem:[#allocation3 + $0x140] sm:$0xff] %v1109
    %1111 = vst [vmem:[#allocation3 + $0x148] sm:$0xff] %v1108
    %1112 = vst [vmem:[#allocation3 + $0x150] sm:$0xff] %v1107
    %1113 = vst [vmem:[#allocation3 + $0x158] sm:$0xff] %v1106
    %1114 = vst [vmem:[#allocation3 + $0x160] sm:$0xff] %v1105
    %1115 = vst [vmem:[#allocation3 + $0x168] sm:$0xff] %v1104
    %1116 = vst [vmem:[#allocation3 + $0x170] sm:$0xff] %v1103
    %1117 = vst [vmem:[#allocation3 + $0x178] sm:$0xff] %v1102
    %1118 = vst [vmem:[#allocation3 + $0x180] sm:$0xff] %v914
    %1119 = vst [vmem:[#allocation3 + $0x188] sm:$0xff] %v915
    %1120 = vst [vmem:[#allocation3 + $0x190] sm:$0xff] %v916
    %1121 = vst [vmem:[#allocation3 + $0x198] sm:$0xff] %v917
    %1122 = vst [vmem:[#allocation3 + $0x1a0] sm:$0xff] %v918
    %1123 = vst [vmem:[#allocation3 + $0x1a8] sm:$0xff] %v919
    %1124 = vst [vmem:[#allocation3 + $0x1b0] sm:$0xff] %v920
    %1125 = vst [vmem:[#allocation3 + $0x1b8] sm:$0xff] %v921
    %1126 = vrot.lane.b32.xlu0 %v914, 127
    %v1127 = vpop.permute.xlu0 %1126
    %1128 = vrot.lane.b32.xlu0 %v915, 127
    %v1129 = vpop.permute.xlu0 %1128
    %1130 = vrot.lane.b32.xlu0 %v916, 127
    %v1131 = vpop.permute.xlu0 %1130
    %1132 = vrot.lane.b32.xlu0 %v917, 127
    %v1133 = vpop.permute.xlu0 %1132
    %1134 = vrot.lane.b32.xlu0 %v918, 127
    %v1135 = vpop.permute.xlu0 %1134
    %1136 = vrot.lane.b32.xlu0 %v919, 127
    %v1137 = vpop.permute.xlu0 %1136
    %1138 = vrot.lane.b32.xlu0 %v920, 127
    %v1139 = vpop.permute.xlu0 %1138
    %1140 = vrot.lane.b32.xlu0 %v921, 127
    %v1141 = vpop.permute.xlu0 %1140
    %v1142 = vsel %vm263, %v1139, %v1141
    %v1143 = vsel %vm263, %v1137, %v1139
    %v1144 = vsel %vm263, %v1135, %v1137
    %v1145 = vsel %vm263, %v1133, %v1135
    %v1146 = vsel %vm263, %v1131, %v1133
    %v1147 = vsel %vm263, %v1129, %v1131
    %v1148 = vsel %vm263, %v1127, %v1129
    %v1149 = vsel %vm263, %v1141, %v1127
    %1150 = vst [vmem:[#allocation3 + $0x1c0] sm:$0xff] %v1148
    %1151 = vst [vmem:[#allocation3 + $0x1c8] sm:$0xff] %v1147
    %1152 = vst [vmem:[#allocation3 + $0x1d0] sm:$0xff] %v1146
    %1153 = vst [vmem:[#allocation3 + $0x1d8] sm:$0xff] %v1145
    %1154 = vst [vmem:[#allocation3 + $0x1e0] sm:$0xff] %v1144
    %1155 = vst [vmem:[#allocation3 + $0x1e8] sm:$0xff] %v1143
    %1156 = vst [vmem:[#allocation3 + $0x1f0] sm:$0xff] %v1142
    %1157 = vst [vmem:[#allocation3 + $0x1f8] sm:$0xff] %v1149
    %1158 = vrot.lane.b32.xlu0 %v914, 126
    %v1159 = vpop.permute.xlu0 %1158
    %1160 = vrot.lane.b32.xlu0 %v915, 126
    %v1161 = vpop.permute.xlu0 %1160
    %1162 = vrot.lane.b32.xlu0 %v916, 126
    %v1163 = vpop.permute.xlu0 %1162
    %1164 = vrot.lane.b32.xlu0 %v917, 126
    %v1165 = vpop.permute.xlu0 %1164
    %1166 = vrot.lane.b32.xlu0 %v918, 126
    %v1167 = vpop.permute.xlu0 %1166
    %1168 = vrot.lane.b32.xlu0 %v919, 126
    %v1169 = vpop.permute.xlu0 %1168
    %1170 = vrot.lane.b32.xlu0 %v920, 126
    %v1171 = vpop.permute.xlu0 %1170
    %1172 = vrot.lane.b32.xlu0 %v921, 126
    %v1173 = vpop.permute.xlu0 %1172
    %v1174 = vsel %vm349, %v1171, %v1173
    %v1175 = vsel %vm349, %v1169, %v1171
    %v1176 = vsel %vm349, %v1167, %v1169
    %v1177 = vsel %vm349, %v1165, %v1167
    %v1178 = vsel %vm349, %v1163, %v1165
    %v1179 = vsel %vm349, %v1161, %v1163
    %v1180 = vsel %vm349, %v1159, %v1161
    %v1181 = vsel %vm349, %v1173, %v1159
    %1182 = vst [vmem:[#allocation3 + $0x200] sm:$0xff] %v1180
    %1183 = vst [vmem:[#allocation3 + $0x208] sm:$0xff] %v1179
    %1184 = vst [vmem:[#allocation3 + $0x210] sm:$0xff] %v1178
    %1185 = vst [vmem:[#allocation3 + $0x218] sm:$0xff] %v1177
    %1186 = vst [vmem:[#allocation3 + $0x220] sm:$0xff] %v1176
    %1187 = vst [vmem:[#allocation3 + $0x228] sm:$0xff] %v1175
    %1188 = vst [vmem:[#allocation3 + $0x230] sm:$0xff] %v1174
    %1189 = vst [vmem:[#allocation3 + $0x238] sm:$0xff] %v1181
    %1190 = vrot.lane.b32.xlu0 %v914, 125
    %v1191 = vpop.permute.xlu0 %1190
    %1192 = vrot.lane.b32.xlu0 %v915, 125
    %v1193 = vpop.permute.xlu0 %1192
    %1194 = vrot.lane.b32.xlu0 %v916, 125
    %v1195 = vpop.permute.xlu0 %1194
    %1196 = vrot.lane.b32.xlu0 %v917, 125
    %v1197 = vpop.permute.xlu0 %1196
    %1198 = vrot.lane.b32.xlu0 %v918, 125
    %v1199 = vpop.permute.xlu0 %1198
    %1200 = vrot.lane.b32.xlu0 %v919, 125
    %v1201 = vpop.permute.xlu0 %1200
    %1202 = vrot.lane.b32.xlu0 %v920, 125
    %v1203 = vpop.permute.xlu0 %1202
    %1204 = vrot.lane.b32.xlu0 %v921, 125
    %v1205 = vpop.permute.xlu0 %1204
    %vm1206 = vcmp.lt.s32.totalorder %v88, 125
    %v1207 = vsel %vm1206, %v1203, %v1205
    %v1208 = vsel %vm1206, %v1201, %v1203
    %v1209 = vsel %vm1206, %v1199, %v1201
    %v1210 = vsel %vm1206, %v1197, %v1199
    %v1211 = vsel %vm1206, %v1195, %v1197
    %v1212 = vsel %vm1206, %v1193, %v1195
    %v1213 = vsel %vm1206, %v1191, %v1193
    %v1214 = vsel %vm1206, %v1205, %v1191
    %1215 = vst [vmem:[#allocation3 + $0x240] sm:$0xff] %v1213
    %1216 = vst [vmem:[#allocation3 + $0x248] sm:$0xff] %v1212
    %1217 = vst [vmem:[#allocation3 + $0x250] sm:$0xff] %v1211
    %1218 = vst [vmem:[#allocation3 + $0x258] sm:$0xff] %v1210
    %1219 = vst [vmem:[#allocation3 + $0x260] sm:$0xff] %v1209
    %1220 = vst [vmem:[#allocation3 + $0x268] sm:$0xff] %v1208
    %1221 = vst [vmem:[#allocation3 + $0x270] sm:$0xff] %v1207
    %1222 = vst [vmem:[#allocation3 + $0x278] sm:$0xff] %v1214
    %1223 = vrot.lane.b32.xlu0 %v914, 124
    %v1224 = vpop.permute.xlu0 %1223
    %1225 = vrot.lane.b32.xlu0 %v915, 124
    %v1226 = vpop.permute.xlu0 %1225
    %1227 = vrot.lane.b32.xlu0 %v916, 124
    %v1228 = vpop.permute.xlu0 %1227
    %1229 = vrot.lane.b32.xlu0 %v917, 124
    %v1230 = vpop.permute.xlu0 %1229
    %1231 = vrot.lane.b32.xlu0 %v918, 124
    %v1232 = vpop.permute.xlu0 %1231
    %1233 = vrot.lane.b32.xlu0 %v919, 124
    %v1234 = vpop.permute.xlu0 %1233
    %1235 = vrot.lane.b32.xlu0 %v920, 124
    %v1236 = vpop.permute.xlu0 %1235
    %1237 = vrot.lane.b32.xlu0 %v921, 124
    %v1238 = vpop.permute.xlu0 %1237
    %vm1239 = vcmp.lt.s32.totalorder %v88, 124
    %v1240 = vsel %vm1239, %v1236, %v1238
    %v1241 = vsel %vm1239, %v1234, %v1236
    %v1242 = vsel %vm1239, %v1232, %v1234
    %v1243 = vsel %vm1239, %v1230, %v1232
    %v1244 = vsel %vm1239, %v1228, %v1230
    %v1245 = vsel %vm1239, %v1226, %v1228
    %v1246 = vsel %vm1239, %v1224, %v1226
    %v1247 = vsel %vm1239, %v1238, %v1224
    %1248 = vst [vmem:[#allocation3 + $0x280] sm:$0xff] %v1246
    %1249 = vst [vmem:[#allocation3 + $0x288] sm:$0xff] %v1245
    %1250 = vst [vmem:[#allocation3 + $0x290] sm:$0xff] %v1244
    %1251 = vst [vmem:[#allocation3 + $0x298] sm:$0xff] %v1243
    %1252 = vst [vmem:[#allocation3 + $0x2a0] sm:$0xff] %v1242
    %1253 = vst [vmem:[#allocation3 + $0x2a8] sm:$0xff] %v1241
    %1254 = vst [vmem:[#allocation3 + $0x2b0] sm:$0xff] %v1240
    %1255 = vst [vmem:[#allocation3 + $0x2b8] sm:$0xff] %v1247
    %1256 = vrot.lane.b32.xlu0 %v914, 123
    %v1257 = vpop.permute.xlu0 %1256
    %1258 = vrot.lane.b32.xlu0 %v915, 123
    %v1259 = vpop.permute.xlu0 %1258
    %1260 = vrot.lane.b32.xlu0 %v916, 123
    %v1261 = vpop.permute.xlu0 %1260
    %1262 = vrot.lane.b32.xlu0 %v917, 123
    %v1263 = vpop.permute.xlu0 %1262
    %1264 = vrot.lane.b32.xlu0 %v918, 123
    %v1265 = vpop.permute.xlu0 %1264
    %1266 = vrot.lane.b32.xlu0 %v919, 123
    %v1267 = vpop.permute.xlu0 %1266
    %1268 = vrot.lane.b32.xlu0 %v920, 123
    %v1269 = vpop.permute.xlu0 %1268
    %1270 = vrot.lane.b32.xlu0 %v921, 123
    %v1271 = vpop.permute.xlu0 %1270
    %vm1272 = vcmp.lt.s32.totalorder %v88, 123
    %v1273 = vsel %vm1272, %v1269, %v1271
    %v1274 = vsel %vm1272, %v1267, %v1269
    %v1275 = vsel %vm1272, %v1265, %v1267
    %v1276 = vsel %vm1272, %v1263, %v1265
    %v1277 = vsel %vm1272, %v1261, %v1263
    %v1278 = vsel %vm1272, %v1259, %v1261
    %v1279 = vsel %vm1272, %v1257, %v1259
    %v1280 = vsel %vm1272, %v1271, %v1257
    %1281 = vst [vmem:[#allocation3 + $0x2c0] sm:$0xff] %v1279
    %1282 = vst [vmem:[#allocation3 + $0x2c8] sm:$0xff] %v1278
    %1283 = vst [vmem:[#allocation3 + $0x2d0] sm:$0xff] %v1277
    %1284 = vst [vmem:[#allocation3 + $0x2d8] sm:$0xff] %v1276
    %1285 = vst [vmem:[#allocation3 + $0x2e0] sm:$0xff] %v1275
    %1286 = vst [vmem:[#allocation3 + $0x2e8] sm:$0xff] %v1274
    %1287 = vst [vmem:[#allocation3 + $0x2f0] sm:$0xff] %v1273
    %1288 = vst [vmem:[#allocation3 + $0x2f8] sm:$0xff] %v1280
    %1289 = vrot.lane.b32.xlu0 %v914, 122
    %v1290 = vpop.permute.xlu0 %1289
    %1291 = vrot.lane.b32.xlu0 %v915, 122
    %v1292 = vpop.permute.xlu0 %1291
    %1293 = vrot.lane.b32.xlu0 %v916, 122
    %v1294 = vpop.permute.xlu0 %1293
    %1295 = vrot.lane.b32.xlu0 %v917, 122
    %v1296 = vpop.permute.xlu0 %1295
    %1297 = vrot.lane.b32.xlu0 %v918, 122
    %v1298 = vpop.permute.xlu0 %1297
    %1299 = vrot.lane.b32.xlu0 %v919, 122
    %v1300 = vpop.permute.xlu0 %1299
    %1301 = vrot.lane.b32.xlu0 %v920, 122
    %v1302 = vpop.permute.xlu0 %1301
    %1303 = vrot.lane.b32.xlu0 %v921, 122
    %v1304 = vpop.permute.xlu0 %1303
    %vm1305 = vcmp.lt.s32.totalorder %v88, 122
    %v1306 = vsel %vm1305, %v1302, %v1304
    %v1307 = vsel %vm1305, %v1300, %v1302
    %v1308 = vsel %vm1305, %v1298, %v1300
    %v1309 = vsel %vm1305, %v1296, %v1298
    %v1310 = vsel %vm1305, %v1294, %v1296
    %v1311 = vsel %vm1305, %v1292, %v1294
    %v1312 = vsel %vm1305, %v1290, %v1292
    %v1313 = vsel %vm1305, %v1304, %v1290
    %1314 = vst [vmem:[#allocation3 + $0x300] sm:$0xff] %v1312
    %1315 = vst [vmem:[#allocation3 + $0x308] sm:$0xff] %v1311
    %1316 = vst [vmem:[#allocation3 + $0x310] sm:$0xff] %v1310
    %1317 = vst [vmem:[#allocation3 + $0x318] sm:$0xff] %v1309
    %1318 = vst [vmem:[#allocation3 + $0x320] sm:$0xff] %v1308
    %1319 = vst [vmem:[#allocation3 + $0x328] sm:$0xff] %v1307
    %1320 = vst [vmem:[#allocation3 + $0x330] sm:$0xff] %v1306
    %1321 = vst [vmem:[#allocation3 + $0x338] sm:$0xff] %v1313
    %v1322 = vld [vmem:[%s3] sm:$0xff]
    %v1323 = vld [vmem:[#allocation3] sm:$0xff]
    %v1324 = vld [vmem:[#allocation3 + $0x8] sm:$0xff]
    %v1325 = vld [vmem:[#allocation3 + $0x10] sm:$0xff]
    %v1326 = vld [vmem:[#allocation3 + $0x18] sm:$0xff]
    %v1327 = vld [vmem:[#allocation3 + $0x20] sm:$0xff]
    %v1328 = vld [vmem:[#allocation3 + $0x28] sm:$0xff]
    %v1329 = vld [vmem:[#allocation3 + $0x30] sm:$0xff]
    %v1330 = vld [vmem:[#allocation3 + $0x38] sm:$0xff]
    %v1331 = vld [vmem:[#allocation3 + $0x40] sm:$0xff]
    %v1332 = vld [vmem:[#allocation3 + $0x48] sm:$0xff]
    %v1333 = vld [vmem:[#allocation3 + $0x50] sm:$0xff]
    %v1334 = vld [vmem:[#allocation3 + $0x58] sm:$0xff]
    %v1335 = vld [vmem:[#allocation3 + $0x60] sm:$0xff]
    %v1336 = vld [vmem:[#allocation3 + $0x68] sm:$0xff]
    %v1337 = vld [vmem:[#allocation3 + $0x70] sm:$0xff]
    %v1338 = vld [vmem:[#allocation3 + $0x78] sm:$0xff]
    %v1339 = vld [vmem:[#allocation3 + $0x80] sm:$0xff]
    %v1340 = vld [vmem:[#allocation3 + $0x88] sm:$0xff]
    %v1341 = vld [vmem:[#allocation3 + $0x90] sm:$0xff]
    %v1342 = vld [vmem:[#allocation3 + $0x98] sm:$0xff]
    %v1343 = vld [vmem:[#allocation3 + $0xa0] sm:$0xff]
    %v1344 = vld [vmem:[#allocation3 + $0xa8] sm:$0xff]
    %v1345 = vld [vmem:[#allocation3 + $0xb0] sm:$0xff]
    %v1346 = vld [vmem:[#allocation3 + $0xb8] sm:$0xff]
    %v1347 = vld [vmem:[#allocation3 + $0xc0] sm:$0xff]
    %v1348 = vld [vmem:[#allocation3 + $0xc8] sm:$0xff]
    %v1349 = vld [vmem:[#allocation3 + $0xd0] sm:$0xff]
    %v1350 = vld [vmem:[#allocation3 + $0xd8] sm:$0xff]
    %v1351 = vld [vmem:[#allocation3 + $0xe0] sm:$0xff]
    %v1352 = vld [vmem:[#allocation3 + $0xe8] sm:$0xff]
    %v1353 = vld [vmem:[#allocation3 + $0xf0] sm:$0xff]
    %v1354 = vld [vmem:[#allocation3 + $0xf8] sm:$0xff]
    %v1355 = vld [vmem:[#allocation3 + $0x100] sm:$0xff]
    %v1356 = vld [vmem:[#allocation3 + $0x108] sm:$0xff]
    %v1357 = vld [vmem:[#allocation3 + $0x110] sm:$0xff]
    %v1358 = vld [vmem:[#allocation3 + $0x118] sm:$0xff]
    %v1359 = vld [vmem:[#allocation3 + $0x120] sm:$0xff]
    %v1360 = vld [vmem:[#allocation3 + $0x128] sm:$0xff]
    %v1361 = vld [vmem:[#allocation3 + $0x130] sm:$0xff]
    %v1362 = vld [vmem:[#allocation3 + $0x138] sm:$0xff]
    %v1363 = vld [vmem:[#allocation3 + $0x140] sm:$0xff]
    %v1364 = vld [vmem:[#allocation3 + $0x148] sm:$0xff]
    %v1365 = vld [vmem:[#allocation3 + $0x150] sm:$0xff]
    %v1366 = vld [vmem:[#allocation3 + $0x158] sm:$0xff]
    %v1367 = vld [vmem:[#allocation3 + $0x160] sm:$0xff]
    %v1368 = vld [vmem:[#allocation3 + $0x168] sm:$0xff]
    %v1369 = vld [vmem:[#allocation3 + $0x170] sm:$0xff]
    %v1370 = vld [vmem:[#allocation3 + $0x178] sm:$0xff]
    %v1371 = vld [vmem:[#allocation3 + $0x180] sm:$0xff]
    %v1372 = vld [vmem:[#allocation3 + $0x188] sm:$0xff]
    %v1373 = vld [vmem:[#allocation3 + $0x190] sm:$0xff]
    %v1374 = vld [vmem:[#allocation3 + $0x198] sm:$0xff]
    %v1375 = vld [vmem:[#allocation3 + $0x1a0] sm:$0xff]
    %v1376 = vld [vmem:[#allocation3 + $0x1a8] sm:$0xff]
    %v1377 = vld [vmem:[#allocation3 + $0x1b0] sm:$0xff]
    %v1378 = vld [vmem:[#allocation3 + $0x1b8] sm:$0xff]
    %v1379 = vld [vmem:[#allocation3 + $0x1c0] sm:$0xff]
    %v1380 = vld [vmem:[#allocation3 + $0x1c8] sm:$0xff]
    %v1381 = vld [vmem:[#allocation3 + $0x1d0] sm:$0xff]
    %v1382 = vld [vmem:[#allocation3 + $0x1d8] sm:$0xff]
    %v1383 = vld [vmem:[#allocation3 + $0x1e0] sm:$0xff]
    %v1384 = vld [vmem:[#allocation3 + $0x1e8] sm:$0xff]
    %v1385 = vld [vmem:[#allocation3 + $0x1f0] sm:$0xff]
    %v1386 = vld [vmem:[#allocation3 + $0x1f8] sm:$0xff]
    %v1387 = vld [vmem:[#allocation3 + $0x200] sm:$0xff]
    %v1388 = vld [vmem:[#allocation3 + $0x208] sm:$0xff]
    %v1389 = vld [vmem:[#allocation3 + $0x210] sm:$0xff]
    %v1390 = vld [vmem:[#allocation3 + $0x218] sm:$0xff]
    %v1391 = vld [vmem:[#allocation3 + $0x220] sm:$0xff]
    %v1392 = vld [vmem:[#allocation3 + $0x228] sm:$0xff]
    %v1393 = vld [vmem:[#allocation3 + $0x230] sm:$0xff]
    %v1394 = vld [vmem:[#allocation3 + $0x238] sm:$0xff]
    %v1395 = vld [vmem:[#allocation3 + $0x240] sm:$0xff]
    %v1396 = vld [vmem:[#allocation3 + $0x248] sm:$0xff]
    %v1397 = vld [vmem:[#allocation3 + $0x250] sm:$0xff]
    %v1398 = vld [vmem:[#allocation3 + $0x258] sm:$0xff]
    %v1399 = vld [vmem:[#allocation3 + $0x260] sm:$0xff]
    %v1400 = vld [vmem:[#allocation3 + $0x268] sm:$0xff]
    %v1401 = vld [vmem:[#allocation3 + $0x270] sm:$0xff]
    %v1402 = vld [vmem:[#allocation3 + $0x278] sm:$0xff]
    %v1403 = vld [vmem:[#allocation3 + $0x280] sm:$0xff]
    %v1404 = vld [vmem:[#allocation3 + $0x288] sm:$0xff]
    %v1405 = vld [vmem:[#allocation3 + $0x290] sm:$0xff]
    %v1406 = vld [vmem:[#allocation3 + $0x298] sm:$0xff]
    %v1407 = vld [vmem:[#allocation3 + $0x2a0] sm:$0xff]
    %v1408 = vld [vmem:[#allocation3 + $0x2a8] sm:$0xff]
    %v1409 = vld [vmem:[#allocation3 + $0x2b0] sm:$0xff]
    %v1410 = vld [vmem:[#allocation3 + $0x2b8] sm:$0xff]
    %v1411 = vld [vmem:[#allocation3 + $0x2c0] sm:$0xff]
    %v1412 = vld [vmem:[#allocation3 + $0x2c8] sm:$0xff]
    %v1413 = vld [vmem:[#allocation3 + $0x2d0] sm:$0xff]
    %v1414 = vld [vmem:[#allocation3 + $0x2d8] sm:$0xff]
    %v1415 = vld [vmem:[#allocation3 + $0x2e0] sm:$0xff]
    %v1416 = vld [vmem:[#allocation3 + $0x2e8] sm:$0xff]
    %v1417 = vld [vmem:[#allocation3 + $0x2f0] sm:$0xff]
    %v1418 = vld [vmem:[#allocation3 + $0x2f8] sm:$0xff]
    %v1419 = vld [vmem:[#allocation3 + $0x300] sm:$0xff]
    %v1420 = vld [vmem:[#allocation3 + $0x308] sm:$0xff]
    %v1421 = vld [vmem:[#allocation3 + $0x310] sm:$0xff]
    %v1422 = vld [vmem:[#allocation3 + $0x318] sm:$0xff]
    %v1423 = vld [vmem:[#allocation3 + $0x320] sm:$0xff]
    %v1424 = vld [vmem:[#allocation3 + $0x328] sm:$0xff]
    %v1425 = vld [vmem:[#allocation3 + $0x330] sm:$0xff]
    %v1426 = vld [vmem:[#allocation3 + $0x338] sm:$0xff]
    %vm1427 = vcmask 850944
    %v1429 = vsel %vm1427, %v1322, 0
    %1431 = vmatprep.subr.mxu0 0.0
    %1432 = vmatpush1.msra.mxu0 0.0
    %1433 = vmatprep.subr.mxu0 0.0
    %1434 = vmatpush1.msra.mxu0 0.0
    %1435 = vmatprep.subr.mxu0 0.0
    %1436 = vmatpush1.msra.mxu0 0.0
    %1437 = vmatprep.subr.mxu0 %v1420
    %1438 = vmatpush1.msra.mxu0 %v1419
    %1439 = vmatprep.subr.mxu0 %v1412
    %1440 = vmatpush1.msra.mxu0 %v1411
    %1441 = vmatprep.subr.mxu0 %v1404
    %1442 = vmatpush1.msra.mxu0 %v1403
    %1443 = vmatprep.subr.mxu0 %v1396
    %1444 = vmatpush1.msra.mxu0 %v1395
    %1445 = vmatprep.subr.mxu0 %v1388
    %1446 = vmatpush1.msra.mxu0 %v1387
    %1447 = vmatprep.subr.mxu0 %v1380
    %1448 = vmatpush1.msra.mxu0 %v1379
    %1449 = vmatprep.subr.mxu0 %v1372
    %1450 = vmatpush1.msra.mxu0 %v1371
    %1451 = vmatprep.subr.mxu0 %v1364
    %1452 = vmatpush1.msra.mxu0 %v1363
    %1453 = vmatprep.subr.mxu0 %v1356
    %1454 = vmatpush1.msra.mxu0 %v1355
    %1455 = vmatprep.subr.mxu0 %v1348
    %1456 = vmatpush1.msra.mxu0 %v1347
    %1457 = vmatprep.subr.mxu0 %v1340
    %1458 = vmatpush1.msra.mxu0 %v1339
    %1459 = vmatprep.subr.mxu0 %v1332
    %1460 = vmatpush1.msra.mxu0 %v1331
    %1461 = vmatprep.subr.mxu0 %v1324
    %1462 = vmatpush1.msra.mxu0 %v1323
    %1463 = vmatprep.subr.mxu0 0.0
    %1464 = vmatpush2.msra.mxu0 0.0
    %1465 = vmatprep.subr.mxu0 0.0
    %1466 = vmatpush2.msra.mxu0 0.0
    %1467 = vmatprep.subr.mxu0 0.0
    %1468 = vmatpush2.msra.mxu0 0.0
    %1469 = vmatprep.subr.mxu0 0.0
    %1470 = vmatpush2.msra.mxu0 0.0
    %1471 = vmatprep.subr.mxu0 0.0
    %1472 = vmatpush2.msra.mxu0 0.0
    %1473 = vmatprep.subr.mxu0 0.0
    %1474 = vmatpush2.msra.mxu0 0.0
    %1475 = vmatprep.subr.mxu0 0.0
    %1476 = vmatpush2.msra.mxu0 0.0
    %1477 = vmatprep.subr.mxu0 0.0
    %1478 = vmatpush2.msra.mxu0 0.0
    %1479 = vmatprep.subr.mxu0 0.0
    %1480 = vmatpush2.msra.mxu0 0.0
    %1481 = vmatprep.subr.mxu0 0.0
    %1482 = vmatpush2.msra.mxu0 0.0
    %1483 = vmatprep.subr.mxu0 0.0
    %1484 = vmatpush2.msra.mxu0 0.0
    %1485 = vmatprep.subr.mxu0 0.0
    %1486 = vmatpush2.msra.mxu0 0.0
    %1487 = vmatprep.subr.mxu0 0.0
    %1488 = vmatpush2.msra.mxu0 0.0
    %1489 = vmatprep.subr.mxu0 0.0
    %1490 = vmatpush2.msra.mxu0 0.0
    %1491 = vmatprep.subr.mxu0 0.0
    %1492 = vmatpush2.msra.mxu0 0.0
    %1493 = vmatprep.subr.mxu0 0.0
    %1494 = vmatpush2.msra.mxu0 0.0
    %1495 = vmatprep.mubr.f32.mxu0 0.0
    %1496 = vmatmul.mubr.f32.gmra.mxu0 %v1429
    %v1497 = vpop.f32.mrf.mxu0
    %v1498 = vadd.f32 0.0, %v1497
    %v1499 = vpop.f32.mrf.mxu0
    %v1500 = vadd.f32 0.0, %v1499
    %1501 = vdwg.mxu0
    %1502 = vmatprep.subr.mxu0 0.0
    %1503 = vmatpush1.msra.mxu0 0.0
    %1504 = vmatprep.subr.mxu0 0.0
    %1505 = vmatpush1.msra.mxu0 0.0
    %1506 = vmatprep.subr.mxu0 0.0
    %1507 = vmatpush1.msra.mxu0 0.0
    %1508 = vmatprep.subr.mxu0 %v1422
    %1509 = vmatpush1.msra.mxu0 %v1421
    %1510 = vmatprep.subr.mxu0 %v1414
    %1511 = vmatpush1.msra.mxu0 %v1413
    %1512 = vmatprep.subr.mxu0 %v1406
    %1513 = vmatpush1.msra.mxu0 %v1405
    %1514 = vmatprep.subr.mxu0 %v1398
    %1515 = vmatpush1.msra.mxu0 %v1397
    %1516 = vmatprep.subr.mxu0 %v1390
    %1517 = vmatpush1.msra.mxu0 %v1389
    %1518 = vmatprep.subr.mxu0 %v1382
    %1519 = vmatpush1.msra.mxu0 %v1381
    %1520 = vmatprep.subr.mxu0 %v1374
    %1521 = vmatpush1.msra.mxu0 %v1373
    %1522 = vmatprep.subr.mxu0 %v1366
    %1523 = vmatpush1.msra.mxu0 %v1365
    %1524 = vmatprep.subr.mxu0 %v1358
    %1525 = vmatpush1.msra.mxu0 %v1357
    %1526 = vmatprep.subr.mxu0 %v1350
    %1527 = vmatpush1.msra.mxu0 %v1349
    %1528 = vmatprep.subr.mxu0 %v1342
    %1529 = vmatpush1.msra.mxu0 %v1341
    %1530 = vmatprep.subr.mxu0 %v1334
    %1531 = vmatpush1.msra.mxu0 %v1333
    %1532 = vmatprep.subr.mxu0 %v1326
    %1533 = vmatpush1.msra.mxu0 %v1325
    %1534 = vmatprep.subr.mxu0 0.0
    %1535 = vmatpush2.msra.mxu0 0.0
    %1536 = vmatprep.subr.mxu0 0.0
    %1537 = vmatpush2.msra.mxu0 0.0
    %1538 = vmatprep.subr.mxu0 0.0
    %1539 = vmatpush2.msra.mxu0 0.0
    %1540 = vmatprep.subr.mxu0 0.0
    %1541 = vmatpush2.msra.mxu0 0.0
    %1542 = vmatprep.subr.mxu0 0.0
    %1543 = vmatpush2.msra.mxu0 0.0
    %1544 = vmatprep.subr.mxu0 0.0
    %1545 = vmatpush2.msra.mxu0 0.0
    %1546 = vmatprep.subr.mxu0 0.0
    %1547 = vmatpush2.msra.mxu0 0.0
    %1548 = vmatprep.subr.mxu0 0.0
    %1549 = vmatpush2.msra.mxu0 0.0
    %1550 = vmatprep.subr.mxu0 0.0
    %1551 = vmatpush2.msra.mxu0 0.0
    %1552 = vmatprep.subr.mxu0 0.0
    %1553 = vmatpush2.msra.mxu0 0.0
    %1554 = vmatprep.subr.mxu0 0.0
    %1555 = vmatpush2.msra.mxu0 0.0
    %1556 = vmatprep.subr.mxu0 0.0
    %1557 = vmatpush2.msra.mxu0 0.0
    %1558 = vmatprep.subr.mxu0 0.0
    %1559 = vmatpush2.msra.mxu0 0.0
    %1560 = vmatprep.subr.mxu0 0.0
    %1561 = vmatpush2.msra.mxu0 0.0
    %1562 = vmatprep.subr.mxu0 0.0
    %1563 = vmatpush2.msra.mxu0 0.0
    %1564 = vmatprep.subr.mxu0 0.0
    %1565 = vmatpush2.msra.mxu0 0.0
    %1566 = vmatprep.mubr.f32.mxu0 0.0
    %1567 = vmatmul.mubr.f32.gmra.mxu0 %v1429
    %v1568 = vpop.f32.mrf.mxu0
    %v1569 = vadd.f32 0.0, %v1568
    %v1570 = vpop.f32.mrf.mxu0
    %v1571 = vadd.f32 0.0, %v1570
    %1572 = vdwg.mxu0
    %1573 = vmatprep.subr.mxu0 0.0
    %1574 = vmatpush1.msra.mxu0 0.0
    %1575 = vmatprep.subr.mxu0 0.0
    %1576 = vmatpush1.msra.mxu0 0.0
    %1577 = vmatprep.subr.mxu0 0.0
    %1578 = vmatpush1.msra.mxu0 0.0
    %1579 = vmatprep.subr.mxu0 %v1424
    %1580 = vmatpush1.msra.mxu0 %v1423
    %1581 = vmatprep.subr.mxu0 %v1416
    %1582 = vmatpush1.msra.mxu0 %v1415
    %1583 = vmatprep.subr.mxu0 %v1408
    %1584 = vmatpush1.msra.mxu0 %v1407
    %1585 = vmatprep.subr.mxu0 %v1400
    %1586 = vmatpush1.msra.mxu0 %v1399
    %1587 = vmatprep.subr.mxu0 %v1392
    %1588 = vmatpush1.msra.mxu0 %v1391
    %1589 = vmatprep.subr.mxu0 %v1384
    %1590 = vmatpush1.msra.mxu0 %v1383
    %1591 = vmatprep.subr.mxu0 %v1376
    %1592 = vmatpush1.msra.mxu0 %v1375
    %1593 = vmatprep.subr.mxu0 %v1368
    %1594 = vmatpush1.msra.mxu0 %v1367
    %1595 = vmatprep.subr.mxu0 %v1360
    %1596 = vmatpush1.msra.mxu0 %v1359
    %1597 = vmatprep.subr.mxu0 %v1352
    %1598 = vmatpush1.msra.mxu0 %v1351
    %1599 = vmatprep.subr.mxu0 %v1344
    %1600 = vmatpush1.msra.mxu0 %v1343
    %1601 = vmatprep.subr.mxu0 %v1336
    %1602 = vmatpush1.msra.mxu0 %v1335
    %1603 = vmatprep.subr.mxu0 %v1328
    %1604 = vmatpush1.msra.mxu0 %v1327
    %1605 = vmatprep.subr.mxu0 0.0
    %1606 = vmatpush2.msra.mxu0 0.0
    %1607 = vmatprep.subr.mxu0 0.0
    %1608 = vmatpush2.msra.mxu0 0.0
    %1609 = vmatprep.subr.mxu0 0.0
    %1610 = vmatpush2.msra.mxu0 0.0
    %1611 = vmatprep.subr.mxu0 0.0
    %1612 = vmatpush2.msra.mxu0 0.0
    %1613 = vmatprep.subr.mxu0 0.0
    %1614 = vmatpush2.msra.mxu0 0.0
    %1615 = vmatprep.subr.mxu0 0.0
    %1616 = vmatpush2.msra.mxu0 0.0
    %1617 = vmatprep.subr.mxu0 0.0
    %1618 = vmatpush2.msra.mxu0 0.0
    %1619 = vmatprep.subr.mxu0 0.0
    %1620 = vmatpush2.msra.mxu0 0.0
    %1621 = vmatprep.subr.mxu0 0.0
    %1622 = vmatpush2.msra.mxu0 0.0
    %1623 = vmatprep.subr.mxu0 0.0
    %1624 = vmatpush2.msra.mxu0 0.0
    %1625 = vmatprep.subr.mxu0 0.0
    %1626 = vmatpush2.msra.mxu0 0.0
    %1627 = vmatprep.subr.mxu0 0.0
    %1628 = vmatpush2.msra.mxu0 0.0
    %1629 = vmatprep.subr.mxu0 0.0
    %1630 = vmatpush2.msra.mxu0 0.0
    %1631 = vmatprep.subr.mxu0 0.0
    %1632 = vmatpush2.msra.mxu0 0.0
    %1633 = vmatprep.subr.mxu0 0.0
    %1634 = vmatpush2.msra.mxu0 0.0
    %1635 = vmatprep.subr.mxu0 0.0
    %1636 = vmatpush2.msra.mxu0 0.0
    %1637 = vmatprep.mubr.f32.mxu0 0.0
    %1638 = vmatmul.mubr.f32.gmra.mxu0 %v1429
    %v1639 = vpop.f32.mrf.mxu0
    %v1640 = vadd.f32 0.0, %v1639
    %v1641 = vpop.f32.mrf.mxu0
    %v1642 = vadd.f32 0.0, %v1641
    %1643 = vdwg.mxu0
    %1644 = vmatprep.subr.mxu0 0.0
    %1645 = vmatpush1.msra.mxu0 0.0
    %1646 = vmatprep.subr.mxu0 0.0
    %1647 = vmatpush1.msra.mxu0 0.0
    %1648 = vmatprep.subr.mxu0 0.0
    %1649 = vmatpush1.msra.mxu0 0.0
    %1650 = vmatprep.subr.mxu0 %v1426
    %1651 = vmatpush1.msra.mxu0 %v1425
    %1652 = vmatprep.subr.mxu0 %v1418
    %1653 = vmatpush1.msra.mxu0 %v1417
    %1654 = vmatprep.subr.mxu0 %v1410
    %1655 = vmatpush1.msra.mxu0 %v1409
    %1656 = vmatprep.subr.mxu0 %v1402
    %1657 = vmatpush1.msra.mxu0 %v1401
    %1658 = vmatprep.subr.mxu0 %v1394
    %1659 = vmatpush1.msra.mxu0 %v1393
    %1660 = vmatprep.subr.mxu0 %v1386
    %1661 = vmatpush1.msra.mxu0 %v1385
    %1662 = vmatprep.subr.mxu0 %v1378
    %1663 = vmatpush1.msra.mxu0 %v1377
    %1664 = vmatprep.subr.mxu0 %v1370
    %1665 = vmatpush1.msra.mxu0 %v1369
    %1666 = vmatprep.subr.mxu0 %v1362
    %1667 = vmatpush1.msra.mxu0 %v1361
    %1668 = vmatprep.subr.mxu0 %v1354
    %1669 = vmatpush1.msra.mxu0 %v1353
    %1670 = vmatprep.subr.mxu0 %v1346
    %1671 = vmatpush1.msra.mxu0 %v1345
    %1672 = vmatprep.subr.mxu0 %v1338
    %1673 = vmatpush1.msra.mxu0 %v1337
    %1674 = vmatprep.subr.mxu0 %v1330
    %1675 = vmatpush1.msra.mxu0 %v1329
    %1676 = vmatprep.subr.mxu0 0.0
    %1677 = vmatpush2.msra.mxu0 0.0
    %1678 = vmatprep.subr.mxu0 0.0
    %1679 = vmatpush2.msra.mxu0 0.0
    %1680 = vmatprep.subr.mxu0 0.0
    %1681 = vmatpush2.msra.mxu0 0.0
    %1682 = vmatprep.subr.mxu0 0.0
    %1683 = vmatpush2.msra.mxu0 0.0
    %1684 = vmatprep.subr.mxu0 0.0
    %1685 = vmatpush2.msra.mxu0 0.0
    %1686 = vmatprep.subr.mxu0 0.0
    %1687 = vmatpush2.msra.mxu0 0.0
    %1688 = vmatprep.subr.mxu0 0.0
    %1689 = vmatpush2.msra.mxu0 0.0
    %1690 = vmatprep.subr.mxu0 0.0
    %1691 = vmatpush2.msra.mxu0 0.0
    %1692 = vmatprep.subr.mxu0 0.0
    %1693 = vmatpush2.msra.mxu0 0.0
    %1694 = vmatprep.subr.mxu0 0.0
    %1695 = vmatpush2.msra.mxu0 0.0
    %1696 = vmatprep.subr.mxu0 0.0
    %1697 = vmatpush2.msra.mxu0 0.0
    %1698 = vmatprep.subr.mxu0 0.0
    %1699 = vmatpush2.msra.mxu0 0.0
    %1700 = vmatprep.subr.mxu0 0.0
    %1701 = vmatpush2.msra.mxu0 0.0
    %1702 = vmatprep.subr.mxu0 0.0
    %1703 = vmatpush2.msra.mxu0 0.0
    %1704 = vmatprep.subr.mxu0 0.0
    %1705 = vmatpush2.msra.mxu0 0.0
    %1706 = vmatprep.subr.mxu0 0.0
    %1707 = vmatpush2.msra.mxu0 0.0
    %1708 = vmatprep.mubr.f32.mxu0 0.0
    %1709 = vmatmul.mubr.f32.gmra.mxu0 %v1429
    %v1710 = vpop.f32.mrf.mxu0
    %v1711 = vadd.f32 0.0, %v1710
    %v1712 = vpop.f32.mrf.mxu0
    %v1713 = vadd.f32 0.0, %v1712
    %1714 = vdwg.mxu0
    %v1715 = vmul.f32 %v1498, %v1498
    %v1716 = vmul.f32 %v1500, %v1500
    %v1717 = vmul.f32 %v1569, %v1569
    %v1718 = vmul.f32 %v1571, %v1571
    %v1719 = vmul.f32 %v1640, %v1640
    %v1720 = vmul.f32 %v1642, %v1642
    %v1721 = vmul.f32 %v1711, %v1711
    %v1722 = vmul.f32 %v1713, %v1713
    %v1723 = vrot.slane %v1715, 7
    %v1724 = vrot.slane %v1716, 7
    %v1725 = vrot.slane %v1717, 7
    %v1726 = vrot.slane %v1718, 7
    %v1727 = vrot.slane %v1719, 7
    %v1728 = vrot.slane %v1720, 7
    %v1729 = vrot.slane %v1721, 7
    %v1730 = vrot.slane %v1722, 7
    %v1731 = vsel %vm759, 0.0, %v1723
    %v1732 = vsel %vm759, 0.0, %v1724
    %v1733 = vsel %vm759, 0.0, %v1725
    %v1734 = vsel %vm759, 0.0, %v1726
    %v1735 = vsel %vm759, 0.0, %v1727
    %v1736 = vsel %vm759, 0.0, %v1728
    %v1737 = vsel %vm759, 0.0, %v1729
    %v1738 = vsel %vm759, 0.0, %v1730
    %v1739 = vadd.f32 %v1715, %v1731
    %v1740 = vadd.f32 %v1716, %v1732
    %v1741 = vadd.f32 %v1717, %v1733
    %v1742 = vadd.f32 %v1718, %v1734
    %v1743 = vadd.f32 %v1719, %v1735
    %v1744 = vadd.f32 %v1720, %v1736
    %v1745 = vadd.f32 %v1721, %v1737
    %v1746 = vadd.f32 %v1722, %v1738
    %v1747 = vmul.f32 %v1739, 5e-05
    %v1748 = vmul.f32 %v1740, 5e-05
    %v1749 = vmul.f32 %v1741, 5e-05
    %v1750 = vmul.f32 %v1742, 5e-05
    %v1751 = vmul.f32 %v1743, 5e-05
    %v1752 = vmul.f32 %v1744, 5e-05
    %v1753 = vmul.f32 %v1745, 5e-05
    %v1754 = vmul.f32 %v1746, 5e-05
    %v1755 = vadd.f32 %v1747, 1.0
    %v1756 = vadd.f32 %v1748, 1.0
    %v1757 = vadd.f32 %v1749, 1.0
    %v1758 = vadd.f32 %v1750, 1.0
    %v1759 = vadd.f32 %v1751, 1.0
    %v1760 = vadd.f32 %v1752, 1.0
    %v1761 = vadd.f32 %v1753, 1.0
    %v1762 = vadd.f32 %v1754, 1.0
    %v1763 = vrsqrt.pop %v1755
    %v1764 = vrsqrt.pop %v1756
    %v1765 = vrsqrt.pop %v1757
    %v1766 = vrsqrt.pop %v1758
    %v1767 = vrsqrt.pop %v1759
    %v1768 = vrsqrt.pop %v1760
    %v1769 = vrsqrt.pop %v1761
    %v1770 = vrsqrt.pop %v1762
    %v1771 = vrsqrt.pop %v1763
    %v1772 = vmul.f32 %v1763, %v1771
    %vm1773 = vcmp.eq.f32.partialorder %v1763, inf
    %v1774 = vsel %vm1773, %v1763, %v1772
    %vm1775 = vcmp.eq.f32.partialorder %v1763, 0.0
    %v1776 = vand.u32 %v1763, 2147483648
    %v1777 = vsel %vm1775, %v1776, %v1774
    %v1778 = vrsqrt.pop %v1764
    %v1779 = vmul.f32 %v1764, %v1778
    %vm1780 = vcmp.eq.f32.partialorder %v1764, inf
    %v1781 = vsel %vm1780, %v1764, %v1779
    %vm1782 = vcmp.eq.f32.partialorder %v1764, 0.0
    %v1783 = vand.u32 %v1764, 2147483648
    %v1784 = vsel %vm1782, %v1783, %v1781
    %v1785 = vrsqrt.pop %v1765
    %v1786 = vmul.f32 %v1765, %v1785
    %vm1787 = vcmp.eq.f32.partialorder %v1765, inf
    %v1788 = vsel %vm1787, %v1765, %v1786
    %vm1789 = vcmp.eq.f32.partialorder %v1765, 0.0
    %v1790 = vand.u32 %v1765, 2147483648
    %v1791 = vsel %vm1789, %v1790, %v1788
    %v1792 = vrsqrt.pop %v1766
    %v1793 = vmul.f32 %v1766, %v1792
    %vm1794 = vcmp.eq.f32.partialorder %v1766, inf
    %v1795 = vsel %vm1794, %v1766, %v1793
    %vm1796 = vcmp.eq.f32.partialorder %v1766, 0.0
    %v1797 = vand.u32 %v1766, 2147483648
    %v1798 = vsel %vm1796, %v1797, %v1795
    %v1799 = vrsqrt.pop %v1767
    %v1800 = vmul.f32 %v1767, %v1799
    %vm1801 = vcmp.eq.f32.partialorder %v1767, inf
    %v1802 = vsel %vm1801, %v1767, %v1800
    %vm1803 = vcmp.eq.f32.partialorder %v1767, 0.0
    %v1804 = vand.u32 %v1767, 2147483648
    %v1805 = vsel %vm1803, %v1804, %v1802
    %v1806 = vrsqrt.pop %v1768
    %v1807 = vmul.f32 %v1768, %v1806
    %vm1808 = vcmp.eq.f32.partialorder %v1768, inf
    %v1809 = vsel %vm1808, %v1768, %v1807
    %vm1810 = vcmp.eq.f32.partialorder %v1768, 0.0
    %v1811 = vand.u32 %v1768, 2147483648
    %v1812 = vsel %vm1810, %v1811, %v1809
    %v1813 = vrsqrt.pop %v1769
    %v1814 = vmul.f32 %v1769, %v1813
    %vm1815 = vcmp.eq.f32.partialorder %v1769, inf
    %v1816 = vsel %vm1815, %v1769, %v1814
    %vm1817 = vcmp.eq.f32.partialorder %v1769, 0.0
    %v1818 = vand.u32 %v1769, 2147483648
    %v1819 = vsel %vm1817, %v1818, %v1816
    %v1820 = vrsqrt.pop %v1770
    %v1821 = vmul.f32 %v1770, %v1820
    %vm1822 = vcmp.eq.f32.partialorder %v1770, inf
    %v1823 = vsel %vm1822, %v1770, %v1821
    %vm1824 = vcmp.eq.f32.partialorder %v1770, 0.0
    %v1825 = vand.u32 %v1770, 2147483648
    %v1826 = vsel %vm1824, %v1825, %v1823
    %v1827 = vmul.f32 %v1763, %v1777
    %v1828 = vmul.f32 %v1764, %v1784
    %v1829 = vmul.f32 %v1765, %v1791
    %v1830 = vmul.f32 %v1766, %v1798
    %v1831 = vmul.f32 %v1767, %v1805
    %v1832 = vmul.f32 %v1768, %v1812
    %v1833 = vmul.f32 %v1769, %v1819
    %v1834 = vmul.f32 %v1770, %v1826
    %v1835 = vmul.f32 %v1498, %v1827
    %v1836 = vmul.f32 %v1500, %v1828
    %v1837 = vmul.f32 %v1569, %v1829
    %v1838 = vmul.f32 %v1571, %v1830
    %v1839 = vmul.f32 %v1640, %v1831
    %v1840 = vmul.f32 %v1642, %v1832
    %v1841 = vmul.f32 %v1711, %v1833
    %v1842 = vmul.f32 %v1713, %v1834
    %1843 = vst [vmem:[%s4] sm:$0xff] %v1835
    %1844 = vst [vmem:[%s4 + $0x8] sm:$0xff] %v1836
    %s1845 = scalar_lea.vmem %s4, 16
    %1846 = vst [vmem:[%s1845] sm:$0xff] %v1837
    %1847 = vst [vmem:[%s1845 + $0x8] sm:$0xff] %v1838
    %s1848 = scalar_lea.vmem %s4, 32
    %1849 = vst [vmem:[%s1848] sm:$0xff] %v1839
    %1850 = vst [vmem:[%s1848 + $0x8] sm:$0xff] %v1840
    %s1851 = scalar_lea.vmem %s4, 48
    %1852 = vst [vmem:[%s1851] sm:$0xff] %v1841
    %1853 = vst [vmem:[%s1851 + $0x8] sm:$0xff] %v1842
    // Predicated region
    $region22: #{_forward_impl.1} parent=1 // pred_check
      _
    $region23: #{_forward_impl.1} parent=1 // pred_check_branch
      %1855 = sbr.rel (0) target = $region25
    $region24: #{_forward_impl.1} parent=1 // pred_region
      _
    $region25: #{_forward_impl.1} parent=1 // pred_fallthru
      _
    // Predicated region
    $region26: #{_forward_impl.1} parent=1 // pred_check
      _
    $region27: #{_forward_impl.1} parent=1 // pred_check_branch
      %1857 = sbr.rel (0) target = $region29
    $region28: #{_forward_impl.1} parent=1 // pred_region
      _
    $region29: #{_forward_impl.1} parent=1 // pred_fallthru
      _
    %1858 = vsyncpa [#allocation5], 1

</llo_original>
